<compile_context>
chip_gen: v6e
topology: v6e:2x2x1
jax: 0.10.0
libtpu: 0.0.40
codegen_flags: <defaults>
</compile_context>

<pallas_src>
import math
import functools

import numpy as np
import jax
import jax.numpy as jnp
from jax import lax
from jax.experimental import pallas as pl
from jax.experimental.pallas import tpu as pltpu

EPS = 1e-5  # torch nn.LayerNorm default eps


# ----------------------------------------------------------------------------
# small in-kernel helpers (f32 elementwise math)
# ----------------------------------------------------------------------------
def _layernorm(x, gamma, beta):
    mu = jnp.mean(x, axis=-1, keepdims=True)
    var = jnp.mean((x - mu) ** 2, axis=-1, keepdims=True)
    return (x - mu) * lax.rsqrt(var + EPS) * gamma + beta


def _gelu_tanh(x):
    # tanh-approx GELU: tanh rides the EUP slot (vs ~12 VALU ops for the erf
    # polynomial); |diff| vs exact-erf GELU ~1e-3, far inside tolerance.
    c = math.sqrt(2.0 / math.pi)
    return 0.5 * x * (1.0 + jnp.tanh(c * (x + 0.044715 * (x * x * x))))


# ----------------------------------------------------------------------------
# Kernel 1: LayerNorm1 + depthwise-conv q/k/v (shared bf16 shift matmul)
# ----------------------------------------------------------------------------
def ln_qkv_kernel(x_ref, g1_ref, be1_ref, s_ref,
                  wq_ref, wk_ref, wv_ref, bq_ref, bk_ref, bv_ref,
                  q_ref, k_ref, v_ref, *, tb):
    c = x_ref.shape[-1]
    h = _layernorm(x_ref[...], g1_ref[...], be1_ref[...])        # (R, C) f32
    # one shared bf16 MXU matmul producing all 9 zero-padded spatial shifts;
    # S is 0/1 (exact in bf16) and each output column has a single source, so
    # the only rounding is the bf16 cast of h.
    shifted = jnp.dot(h.astype(jnp.bfloat16), s_ref[...],
                      preferred_element_type=jnp.float32)        # (R, 9C) f32

    def depthwise(w_ref, b_ref):
        w = w_ref[...]                                           # (N, 9)
        b = b_ref[...]                                           # (N, 1)
        if tb > 1:  # per-channel params repeat across the TB batch elements
            w = jnp.concatenate([w] * tb, axis=0)
            b = jnp.concatenate([b] * tb, axis=0)
        acc = shifted[:, 0:c] * w[:, 0:1] + b                    # bias folded into tap 0
        for t in range(1, 9):
            acc = acc + shifted[:, t * c:(t + 1) * c] * w[:, t:t + 1]
        return acc

    q_ref[...] = depthwise(wq_ref, bq_ref)
    k_ref[...] = depthwise(wk_ref, bk_ref)
    v_ref[...] = depthwise(wv_ref, bv_ref)


# ----------------------------------------------------------------------------
# Kernel 2: per-channel attention + (transpose folded into) proj + residual +
#           LayerNorm2 + bf16 MLP + residual
# ----------------------------------------------------------------------------
def attn_post_kernel(x_ref, q_ref, k_ref, v_ref,
                     g2_ref, be2_ref, wp_ref, bp_ref,
                     w1_ref, b1_ref, w2_ref, b2_ref,
                     out_ref, *, tb, n_ch, s, scale):
    r = tb * n_ch
    if tb == 1:
        q3, k3, v3 = q_ref[0], k_ref[0], v_ref[0]                # (N, s, s)
    else:
        q3 = q_ref[...].reshape(r, s, s)                         # leading-dim merge only
        k3 = k_ref[...].reshape(r, s, s)
        v3 = v_ref[...].reshape(r, s, s)

    # per-channel attention: softmax(q @ k^T * scale) @ v on (s, s) tiles
    att = jnp.einsum('nij,nkj->nik', q3, k3,
                     preferred_element_type=jnp.float32) * scale
    att = att - jnp.max(att, axis=-1, keepdims=True)
    e = jnp.exp(att)
    p = e * pl.reciprocal(jnp.sum(e, axis=-1, keepdims=True), approx=True)
    o3 = jnp.einsum('nik,nkj->nij', p, v3,
                    preferred_element_type=jnp.float32)          # (r, s, s)

    # torch: (attn @ v).transpose(1, 2).reshape(B, N, C) followed by proj.
    # With N == s the scramble folds into the projection:
    #   proj[i, :] = sum_n o3[n, i, :] @ Wp^T[n*s:(n+1)*s, :]
    # so no transpose, no relayout, no extra HBM pass.  Wp^T stays f32 here:
    # the K=8 row-block matmuls gain nothing from bf16 and the row-block
    # slices stay 8-sublane aligned.
    wp = wp_ref[...]                                             # (C, C) f32
    projs = []
    for t in range(tb):
        base = t * n_ch
        acc = jnp.dot(o3[base], wp[0:s, :],
                      preferred_element_type=jnp.float32)
        for n in range(1, n_ch):
            acc = acc + jnp.dot(o3[base + n], wp[n * s:(n + 1) * s, :],
                                preferred_element_type=jnp.float32)
        projs.append(acc)
    proj = projs[0] if tb == 1 else jnp.concatenate(projs, axis=0)
    proj = proj + bp_ref[...]

    x1 = x_ref[...] + proj                                       # x + attn(norm1(x))
    h2 = _layernorm(x1, g2_ref[...], be2_ref[...])               # norm2
    u = jnp.dot(h2.astype(jnp.bfloat16), w1_ref[...],
                preferred_element_type=jnp.float32) + b1_ref[...]
    y = jnp.dot(_gelu_tanh(u).astype(jnp.bfloat16), w2_ref[...],
                preferred_element_type=jnp.float32) + b2_ref[...]
    out_ref[...] = x1 + y                                        # x + mlp(norm2(x))


# ----------------------------------------------------------------------------
# wrapper
# ----------------------------------------------------------------------------
def make_shift_matrix(s):
    """S[c_src, t*C + c_dst] = 1 iff source pixel c_src feeds tap t (= di*3+dj)
    of destination pixel c_dst for a 3x3 conv with zero padding 1 on an s x s
    image (row-major flat indices)."""
    c = s * s
    S = np.zeros((c, 9 * c), dtype=np.float32)
    for di in range(3):
        for dj in range(3):
            t = di * 3 + dj
            for i in range(s):
                for j in range(s):
                    ii, jj = i + di - 1, j + dj - 1
                    if 0 <= ii < s and 0 <= jj < s:
                        S[ii * s + jj, t * c + i * s + j] = 1.0
    return S


def _pick_tb(batch, n_tokens, target_rows=256):
    """Batch elements per grid step: aim for >= target_rows matmul rows while
    keeping >=2 grid steps (megacore / v7x dual TensorCore) and divisibility."""
    tb = max(1, min(batch, max(1, target_rows // max(n_tokens, 1))))
    while tb > 1 and batch // tb < 2:
        tb -= 1
    while tb > 1 and batch % tb != 0:
        tb -= 1
    return tb


def conv_block_forward(x, params):
    B, N, C = x.shape
    s = int(math.isqrt(C))
    assert s * s == C, "dim must be a perfect square"
    # TODO(synk): the transpose->proj fold assumes depth_block_channel ==
    # sqrt(dim) (true for the configuration exercised here); the general
    # N != sqrt(C) scramble needs a different in-kernel layout.
    assert N == s, "fused kernel requires depth_block_channel == sqrt(dim)"

    scale = params['scale']
    tb = _pick_tb(B, N)
    grid = (B // tb,)
    R = tb * N

    x2 = x.reshape(B * N, C)            # free: rows are (batch, channel) pairs

    row_spec = pl.BlockSpec((R, C), lambda i: (i, 0))
    spec4 = pl.BlockSpec((tb, N, s, s), lambda i: (i, 0, 0, 0))

    def full(arr):
        return pl.BlockSpec(arr.shape, lambda i, _r=arr.ndim: (0,) * _r)

    cparams = pltpu.CompilerParams(
        dimension_semantics=("parallel",),
        vmem_limit_bytes=32 * 1024 * 1024,
    )

    # ---- kernel 1: LN1 + depthwise q/k/v ------------------------------------
    q2, k2, v2 = pl.pallas_call(
        functools.partial(ln_qkv_kernel, tb=tb),
        out_shape=[jax.ShapeDtypeStruct((B * N, C), jnp.float32)] * 3,
        grid=grid,
        in_specs=[row_spec, full(params['g1']), full(params['be1']),
                  full(params['S']),
                  full(params['wq']), full(params['wk']), full(params['wv']),
                  full(params['bq']), full(params['bk']), full(params['bv'])],
        out_specs=[row_spec, row_spec, row_spec],
        compiler_params=cparams,
    )(x2, params['g1'], params['be1'], params['S'],
      params['wq'], params['wk'], params['wv'],
      params['bq'], params['bk'], params['bv'])

    # free metadata reshape: identical HBM bytes, re-tiled by kernel 2's specs
    q4 = q2.reshape(B, N, s, s)
    k4 = k2.reshape(B, N, s, s)
    v4 = v2.reshape(B, N, s, s)

    # ---- kernel 2: attention + proj(+scramble) + LN2 + MLP ------------------
    out2 = pl.pallas_call(
        functools.partial(attn_post_kernel, tb=tb, n_ch=N, s=s, scale=scale),
        out_shape=jax.ShapeDtypeStruct((B * N, C), jnp.float32),
        grid=grid,
        in_specs=[row_spec, spec4, spec4, spec4,
                  full(params['g2']), full(params['be2']),
                  full(params['wpt']), full(params['bp']),
                  full(params['w1t']), full(params['b1']),
                  full(params['w2t']), full(params['b2'])],
        out_specs=row_spec,
        compiler_params=cparams,
    )(x2, q4, k4, v4,
      params['g2'], params['be2'],
      params['wpt'], params['bp'],
      params['w1t'], params['b1'],
      params['w2t'], params['b2'])

    return out2.reshape(B, N, C)


# ----------------------------------------------------------------------------
# pure-JAX reference (mirrors the PyTorch module, eval mode, drop=0)
# ----------------------------------------------------------------------------
def reference_conv_block(x, g1, be1, wq4, bq, wk4, bk, wv4, bv,
                         wp, bp, g2, be2, w1, b1, w2, b2, num_heads):
    B, N, C = x.shape
    s = int(math.isqrt(C))
    scale = (C // num_heads) ** (-0.5)

    def ln(z, g, b):
        mu = z.mean(-1, keepdims=True)
        var = ((z - mu) ** 2).mean(-1, keepdims=True)
        return (z - mu) / jnp.sqrt(var + EPS) * g + b

    def dw(inp, w, b):
        out = lax.conv_general_dilated(
            inp, w, (1, 1), ((1, 1), (1, 1)),
            dimension_numbers=('NCHW', 'OIHW', 'NCHW'),
            feature_group_count=N)
        return out + b[None, :, None, None]

    h = ln(x, g1, be1)
    h4 = h.reshape(B, N, s, s)
    q, k, v = dw(h4, wq4, bq), dw(h4, wk4, bk), dw(h4, wv4, bv)
    attn = jnp.einsum('bnij,bnkj->bnik', q, k) * scale
    attn = jax.nn.softmax(attn, axis=-1)
    o = jnp.einsum('bnik,bnkj->bnij', attn, v)
    a = jnp.transpose(o, (0, 2, 1, 3)).reshape(B, N, C)
    x1 = x + a @ wp.T + bp
    h2 = ln(x1, g2, be2)
    u = h2 @ w1.T + b1
    u = 0.5 * u * (1.0 + jax.scipy.special.erf(u / math.sqrt(2.0)))
    y = u @ w2.T + b2
    return x1 + y


# ----------------------------------------------------------------------------
if __name__ == "__main__":
    # dim must be a perfect square; depth_block_channel == N (sequence length)
    B, N, C = 2, 8, 64
    num_heads = 4
    mlp_ratio = 4.0
    s = int(math.isqrt(C))
    H = int(C * mlp_ratio)
    f32 = jnp.float32

    key = jax.random.PRNGKey(0)
    ks = jax.random.split(key, 17)
    x = jax.random.normal(ks[0], (B, N, C), f32)

    g1 = 1.0 + 0.1 * jax.random.normal(ks[1], (C,), f32)
    be1 = 0.1 * jax.random.normal(ks[2], (C,), f32)
    g2 = 1.0 + 0.1 * jax.random.normal(ks[3], (C,), f32)
    be2 = 0.1 * jax.random.normal(ks[4], (C,), f32)
    wq4 = 0.2 * jax.random.normal(ks[5], (N, 1, 3, 3), f32)
    wk4 = 0.2 * jax.random.normal(ks[6], (N, 1, 3, 3), f32)
    wv4 = 0.2 * jax.random.normal(ks[7], (N, 1, 3, 3), f32)
    bq = 0.1 * jax.random.normal(ks[8], (N,), f32)
    bk = 0.1 * jax.random.normal(ks[9], (N,), f32)
    bv = 0.1 * jax.random.normal(ks[10], (N,), f32)
    wp = 0.1 * jax.random.normal(ks[11], (C, C), f32)
    bp = 0.1 * jax.random.normal(ks[12], (C,), f32)
    w1 = 0.1 * jax.random.normal(ks[13], (H, C), f32)
    b1 = 0.1 * jax.random.normal(ks[14], (H,), f32)
    w2 = 0.1 * jax.random.normal(ks[15], (C, H), f32)
    b2 = 0.1 * jax.random.normal(ks[16], (C,), f32)

    params = dict(
        g1=g1.reshape(1, C), be1=be1.reshape(1, C),
        g2=g2.reshape(1, C), be2=be2.reshape(1, C),
        # 0/1 shift matrix: exact in bf16, halves VMEM/DMA bytes, bf16 MXU rate
        S=jnp.asarray(make_shift_matrix(s), jnp.bfloat16),
        wq=wq4.reshape(N, 9), wk=wk4.reshape(N, 9), wv=wv4.reshape(N, 9),
        bq=bq.reshape(N, 1), bk=bk.reshape(N, 1), bv=bv.reshape(N, 1),
        wpt=wp.T, bp=bp.reshape(1, C),          # f32: used as K=8 row-blocks
        w1t=w1.T.astype(jnp.bfloat16), b1=b1.reshape(1, H),
        w2t=w2.T.astype(jnp.bfloat16), b2=b2.reshape(1, C),
        scale=float((C // num_heads) ** (-0.5)),
    )

    out = conv_block_forward(x, params)
    out = jax.block_until_ready(out)

    ref = reference_conv_block(x, g1, be1, wq4, bq, wk4, bk, wv4, bv,
                               wp, bp, g2, be2, w1, b1, w2, b2, num_heads)
    ref = jax.block_until_ready(ref)

    err = float(jnp.max(jnp.abs(out - ref)))
    assert out.shape == (B, N, C)
    assert err < 5e-2, f"max abs error too large: {err}"
    print("KERNEL_OK")
</pallas_src>

<mosaic_0001>
module attributes {stable_mosaic.version = 11 : i64} {
  func.func @ln_qkv_kernel(%arg0: i32, %arg1: memref<8x64xf32, #tpu.memory_space<vmem>>, %arg2: memref<1x64xf32, #tpu.memory_space<vmem>>, %arg3: memref<1x64xf32, #tpu.memory_space<vmem>>, %arg4: memref<64x576xbf16, #tpu.memory_space<vmem>>, %arg5: memref<8x9xf32, #tpu.memory_space<vmem>>, %arg6: memref<8x9xf32, #tpu.memory_space<vmem>>, %arg7: memref<8x9xf32, #tpu.memory_space<vmem>>, %arg8: memref<8x1xf32, #tpu.memory_space<vmem>>, %arg9: memref<8x1xf32, #tpu.memory_space<vmem>>, %arg10: memref<8x1xf32, #tpu.memory_space<vmem>>, %arg11: memref<8x64xf32, #tpu.memory_space<vmem>>, %arg12: memref<8x64xf32, #tpu.memory_space<vmem>>, %arg13: memref<8x64xf32, #tpu.memory_space<vmem>>) attributes {dimension_semantics = [#tpu.dimension_semantics<parallel>], iteration_bounds = array<i64: 2>, scalar_prefetch = 0 : i64, scratch_operands = 0 : i64, tpu.core_type = #tpu.core_type<tc>, window_params = [{transform_indices = @transform_0, window_bounds = array<i64: 8, 64>}, {pipeline_mode = #tpu.pipeline_mode<synchronous>, transform_indices = @transform_1, window_bounds = array<i64: 1, 64>}, {pipeline_mode = #tpu.pipeline_mode<synchronous>, transform_indices = @transform_2, window_bounds = array<i64: 1, 64>}, {pipeline_mode = #tpu.pipeline_mode<synchronous>, transform_indices = @transform_3, window_bounds = array<i64: 64, 576>}, {pipeline_mode = #tpu.pipeline_mode<synchronous>, transform_indices = @transform_4, window_bounds = array<i64: 8, 9>}, {pipeline_mode = #tpu.pipeline_mode<synchronous>, transform_indices = @transform_5, window_bounds = array<i64: 8, 9>}, {pipeline_mode = #tpu.pipeline_mode<synchronous>, transform_indices = @transform_6, window_bounds = array<i64: 8, 9>}, {pipeline_mode = #tpu.pipeline_mode<synchronous>, transform_indices = @transform_7, window_bounds = array<i64: 8, 1>}, {pipeline_mode = #tpu.pipeline_mode<synchronous>, transform_indices = @transform_8, window_bounds = array<i64: 8, 1>}, {pipeline_mode = #tpu.pipeline_mode<synchronous>, transform_indices = @transform_9, window_bounds = array<i64: 8, 1>}, {transform_indices = @transform_10, window_bounds = array<i64: 8, 64>}, {transform_indices = @transform_11, window_bounds = array<i64: 8, 64>}, {transform_indices = @transform_12, window_bounds = array<i64: 8, 64>}]} {
    %c0 = arith.constant 0 : index
    %c0_0 = arith.constant 0 : index
    %0 = vector.load %arg1[%c0, %c0_0] : memref<8x64xf32, #tpu.memory_space<vmem>>, vector<8x64xf32>
    %c0_1 = arith.constant 0 : index
    %c0_2 = arith.constant 0 : index
    %1 = vector.load %arg2[%c0_1, %c0_2] : memref<1x64xf32, #tpu.memory_space<vmem>>, vector<1x64xf32>
    %c0_3 = arith.constant 0 : index
    %c0_4 = arith.constant 0 : index
    %2 = vector.load %arg3[%c0_3, %c0_4] : memref<1x64xf32, #tpu.memory_space<vmem>>, vector<1x64xf32>
    %cst = arith.constant dense<0.000000e+00> : vector<8xf32>
    %3 = vector.multi_reduction <add>, %0, %cst [1] : vector<8x64xf32> to vector<8xf32>
    %4 = vector.shape_cast %3 : vector<8xf32> to vector<8x1xf32>
    %cst_5 = arith.constant 6.400000e+01 : f32
    %5 = vector.broadcast %cst_5 : f32 to vector<8x1xf32>
    %6 = arith.divf %4, %5 : vector<8x1xf32>
    %7 = vector.broadcast %6 : vector<8x1xf32> to vector<8x64xf32>
    %8 = arith.subf %0, %7 : vector<8x64xf32>
    %9 = arith.mulf %8, %8 : vector<8x64xf32>
    %cst_6 = arith.constant dense<0.000000e+00> : vector<8xf32>
    %10 = vector.multi_reduction <add>, %9, %cst_6 [1] : vector<8x64xf32> to vector<8xf32>
    %11 = vector.shape_cast %10 : vector<8xf32> to vector<8x1xf32>
    %cst_7 = arith.constant 6.400000e+01 : f32
    %12 = vector.broadcast %cst_7 : f32 to vector<8x1xf32>
    %13 = arith.divf %11, %12 : vector<8x1xf32>
    %14 = vector.broadcast %6 : vector<8x1xf32> to vector<8x64xf32>
    %15 = arith.subf %0, %14 : vector<8x64xf32>
    %cst_8 = arith.constant 9.99999974E-6 : f32
    %16 = vector.broadcast %cst_8 : f32 to vector<8x1xf32>
    %17 = arith.addf %13, %16 : vector<8x1xf32>
    %18 = math.rsqrt %17 : vector<8x1xf32>
    %19 = vector.broadcast %18 : vector<8x1xf32> to vector<8x64xf32>
    %20 = arith.mulf %15, %19 : vector<8x64xf32>
    %21 = vector.broadcast %1 : vector<1x64xf32> to vector<8x64xf32>
    %22 = arith.mulf %20, %21 : vector<8x64xf32>
    %23 = vector.broadcast %2 : vector<1x64xf32> to vector<8x64xf32>
    %24 = arith.addf %22, %23 : vector<8x64xf32>
    %25 = arith.truncf %24 : vector<8x64xf32> to vector<8x64xbf16>
    %c0_9 = arith.constant 0 : index
    %c0_10 = arith.constant 0 : index
    %26 = vector.load %arg4[%c0_9, %c0_10] : memref<64x576xbf16, #tpu.memory_space<vmem>>, vector<64x576xbf16>
    %cst_11 = arith.constant dense<0.000000e+00> : vector<8x576xf32>
    %27 = tpu.matmul %25, %26, %cst_11 {dimension_numbers = #tpu.dot_dimension_numbers<[1], [0], [0], [1], [0, 0, 1, 1], [], []>} : vector<8x64xbf16>, vector<64x576xbf16>, vector<8x576xf32> -> vector<8x576xf32>
    %c0_12 = arith.constant 0 : index
    %c0_13 = arith.constant 0 : index
    %28 = vector.load %arg5[%c0_12, %c0_13] : memref<8x9xf32, #tpu.memory_space<vmem>>, vector<8x9xf32>
    %c0_14 = arith.constant 0 : index
    %c0_15 = arith.constant 0 : index
    %29 = vector.load %arg8[%c0_14, %c0_15] : memref<8x1xf32, #tpu.memory_space<vmem>>, vector<8x1xf32>
    %30 = vector.extract_strided_slice %27 {offsets = [0, 0], sizes = [8, 64], strides = [1, 1]} : vector<8x576xf32> to vector<8x64xf32>
    %31 = vector.extract_strided_slice %28 {offsets = [0, 0], sizes = [8, 1], strides = [1, 1]} : vector<8x9xf32> to vector<8x1xf32>
    %32 = vector.broadcast %31 : vector<8x1xf32> to vector<8x64xf32>
    %33 = arith.mulf %30, %32 : vector<8x64xf32>
    %34 = vector.broadcast %29 : vector<8x1xf32> to vector<8x64xf32>
    %35 = arith.addf %33, %34 : vector<8x64xf32>
    %36 = vector.extract_strided_slice %27 {offsets = [0, 64], sizes = [8, 64], strides = [1, 1]} : vector<8x576xf32> to vector<8x64xf32>
    %37 = vector.extract_strided_slice %28 {offsets = [0, 1], sizes = [8, 1], strides = [1, 1]} : vector<8x9xf32> to vector<8x1xf32>
    %38 = vector.broadcast %37 : vector<8x1xf32> to vector<8x64xf32>
    %39 = arith.mulf %36, %38 : vector<8x64xf32>
    %40 = arith.addf %35, %39 : vector<8x64xf32>
    %41 = vector.extract_strided_slice %27 {offsets = [0, 128], sizes = [8, 64], strides = [1, 1]} : vector<8x576xf32> to vector<8x64xf32>
    %42 = vector.extract_strided_slice %28 {offsets = [0, 2], sizes = [8, 1], strides = [1, 1]} : vector<8x9xf32> to vector<8x1xf32>
    %43 = vector.broadcast %42 : vector<8x1xf32> to vector<8x64xf32>
    %44 = arith.mulf %41, %43 : vector<8x64xf32>
    %45 = arith.addf %40, %44 : vector<8x64xf32>
    %46 = vector.extract_strided_slice %27 {offsets = [0, 192], sizes = [8, 64], strides = [1, 1]} : vector<8x576xf32> to vector<8x64xf32>
    %47 = vector.extract_strided_slice %28 {offsets = [0, 3], sizes = [8, 1], strides = [1, 1]} : vector<8x9xf32> to vector<8x1xf32>
    %48 = vector.broadcast %47 : vector<8x1xf32> to vector<8x64xf32>
    %49 = arith.mulf %46, %48 : vector<8x64xf32>
    %50 = arith.addf %45, %49 : vector<8x64xf32>
    %51 = vector.extract_strided_slice %27 {offsets = [0, 256], sizes = [8, 64], strides = [1, 1]} : vector<8x576xf32> to vector<8x64xf32>
    %52 = vector.extract_strided_slice %28 {offsets = [0, 4], sizes = [8, 1], strides = [1, 1]} : vector<8x9xf32> to vector<8x1xf32>
    %53 = vector.broadcast %52 : vector<8x1xf32> to vector<8x64xf32>
    %54 = arith.mulf %51, %53 : vector<8x64xf32>
    %55 = arith.addf %50, %54 : vector<8x64xf32>
    %56 = vector.extract_strided_slice %27 {offsets = [0, 320], sizes = [8, 64], strides = [1, 1]} : vector<8x576xf32> to vector<8x64xf32>
    %57 = vector.extract_strided_slice %28 {offsets = [0, 5], sizes = [8, 1], strides = [1, 1]} : vector<8x9xf32> to vector<8x1xf32>
    %58 = vector.broadcast %57 : vector<8x1xf32> to vector<8x64xf32>
    %59 = arith.mulf %56, %58 : vector<8x64xf32>
    %60 = arith.addf %55, %59 : vector<8x64xf32>
    %61 = vector.extract_strided_slice %27 {offsets = [0, 384], sizes = [8, 64], strides = [1, 1]} : vector<8x576xf32> to vector<8x64xf32>
    %62 = vector.extract_strided_slice %28 {offsets = [0, 6], sizes = [8, 1], strides = [1, 1]} : vector<8x9xf32> to vector<8x1xf32>
    %63 = vector.broadcast %62 : vector<8x1xf32> to vector<8x64xf32>
    %64 = arith.mulf %61, %63 : vector<8x64xf32>
    %65 = arith.addf %60, %64 : vector<8x64xf32>
    %66 = vector.extract_strided_slice %27 {offsets = [0, 448], sizes = [8, 64], strides = [1, 1]} : vector<8x576xf32> to vector<8x64xf32>
    %67 = vector.extract_strided_slice %28 {offsets = [0, 7], sizes = [8, 1], strides = [1, 1]} : vector<8x9xf32> to vector<8x1xf32>
    %68 = vector.broadcast %67 : vector<8x1xf32> to vector<8x64xf32>
    %69 = arith.mulf %66, %68 : vector<8x64xf32>
    %70 = arith.addf %65, %69 : vector<8x64xf32>
    %71 = vector.extract_strided_slice %27 {offsets = [0, 512], sizes = [8, 64], strides = [1, 1]} : vector<8x576xf32> to vector<8x64xf32>
    %72 = vector.extract_strided_slice %28 {offsets = [0, 8], sizes = [8, 1], strides = [1, 1]} : vector<8x9xf32> to vector<8x1xf32>
    %73 = vector.broadcast %72 : vector<8x1xf32> to vector<8x64xf32>
    %74 = arith.mulf %71, %73 : vector<8x64xf32>
    %75 = arith.addf %70, %74 : vector<8x64xf32>
    %c0_16 = arith.constant 0 : index
    %c0_17 = arith.constant 0 : index
    %76 = vector.load %arg11[%c0_16, %c0_17] : memref<8x64xf32, #tpu.memory_space<vmem>>, vector<8x64xf32>
    tpu.vector_store %arg11[%c0_16, %c0_17], %75 {strides = array<i32>} : memref<8x64xf32, #tpu.memory_space<vmem>>, vector<8x64xf32>,
    %c0_18 = arith.constant 0 : index
    %c0_19 = arith.constant 0 : index
    %77 = vector.load %arg6[%c0_18, %c0_19] : memref<8x9xf32, #tpu.memory_space<vmem>>, vector<8x9xf32>
    %c0_20 = arith.constant 0 : index
    %c0_21 = arith.constant 0 : index
    %78 = vector.load %arg9[%c0_20, %c0_21] : memref<8x1xf32, #tpu.memory_space<vmem>>, vector<8x1xf32>
    %79 = vector.extract_strided_slice %27 {offsets = [0, 0], sizes = [8, 64], strides = [1, 1]} : vector<8x576xf32> to vector<8x64xf32>
    %80 = vector.extract_strided_slice %77 {offsets = [0, 0], sizes = [8, 1], strides = [1, 1]} : vector<8x9xf32> to vector<8x1xf32>
    %81 = vector.broadcast %80 : vector<8x1xf32> to vector<8x64xf32>
    %82 = arith.mulf %79, %81 : vector<8x64xf32>
    %83 = vector.broadcast %78 : vector<8x1xf32> to vector<8x64xf32>
    %84 = arith.addf %82, %83 : vector<8x64xf32>
    %85 = vector.extract_strided_slice %27 {offsets = [0, 64], sizes = [8, 64], strides = [1, 1]} : vector<8x576xf32> to vector<8x64xf32>
    %86 = vector.extract_strided_slice %77 {offsets = [0, 1], sizes = [8, 1], strides = [1, 1]} : vector<8x9xf32> to vector<8x1xf32>
    %87 = vector.broadcast %86 : vector<8x1xf32> to vector<8x64xf32>
    %88 = arith.mulf %85, %87 : vector<8x64xf32>
    %89 = arith.addf %84, %88 : vector<8x64xf32>
    %90 = vector.extract_strided_slice %27 {offsets = [0, 128], sizes = [8, 64], strides = [1, 1]} : vector<8x576xf32> to vector<8x64xf32>
    %91 = vector.extract_strided_slice %77 {offsets = [0, 2], sizes = [8, 1], strides = [1, 1]} : vector<8x9xf32> to vector<8x1xf32>
    %92 = vector.broadcast %91 : vector<8x1xf32> to vector<8x64xf32>
    %93 = arith.mulf %90, %92 : vector<8x64xf32>
    %94 = arith.addf %89, %93 : vector<8x64xf32>
    %95 = vector.extract_strided_slice %27 {offsets = [0, 192], sizes = [8, 64], strides = [1, 1]} : vector<8x576xf32> to vector<8x64xf32>
    %96 = vector.extract_strided_slice %77 {offsets = [0, 3], sizes = [8, 1], strides = [1, 1]} : vector<8x9xf32> to vector<8x1xf32>
    %97 = vector.broadcast %96 : vector<8x1xf32> to vector<8x64xf32>
    %98 = arith.mulf %95, %97 : vector<8x64xf32>
    %99 = arith.addf %94, %98 : vector<8x64xf32>
    %100 = vector.extract_strided_slice %27 {offsets = [0, 256], sizes = [8, 64], strides = [1, 1]} : vector<8x576xf32> to vector<8x64xf32>
    %101 = vector.extract_strided_slice %77 {offsets = [0, 4], sizes = [8, 1], strides = [1, 1]} : vector<8x9xf32> to vector<8x1xf32>
    %102 = vector.broadcast %101 : vector<8x1xf32> to vector<8x64xf32>
    %103 = arith.mulf %100, %102 : vector<8x64xf32>
    %104 = arith.addf %99, %103 : vector<8x64xf32>
    %105 = vector.extract_strided_slice %27 {offsets = [0, 320], sizes = [8, 64], strides = [1, 1]} : vector<8x576xf32> to vector<8x64xf32>
    %106 = vector.extract_strided_slice %77 {offsets = [0, 5], sizes = [8, 1], strides = [1, 1]} : vector<8x9xf32> to vector<8x1xf32>
    %107 = vector.broadcast %106 : vector<8x1xf32> to vector<8x64xf32>
    %108 = arith.mulf %105, %107 : vector<8x64xf32>
    %109 = arith.addf %104, %108 : vector<8x64xf32>
    %110 = vector.extract_strided_slice %27 {offsets = [0, 384], sizes = [8, 64], strides = [1, 1]} : vector<8x576xf32> to vector<8x64xf32>
    %111 = vector.extract_strided_slice %77 {offsets = [0, 6], sizes = [8, 1], strides = [1, 1]} : vector<8x9xf32> to vector<8x1xf32>
    %112 = vector.broadcast %111 : vector<8x1xf32> to vector<8x64xf32>
    %113 = arith.mulf %110, %112 : vector<8x64xf32>
    %114 = arith.addf %109, %113 : vector<8x64xf32>
    %115 = vector.extract_strided_slice %27 {offsets = [0, 448], sizes = [8, 64], strides = [1, 1]} : vector<8x576xf32> to vector<8x64xf32>
    %116 = vector.extract_strided_slice %77 {offsets = [0, 7], sizes = [8, 1], strides = [1, 1]} : vector<8x9xf32> to vector<8x1xf32>
    %117 = vector.broadcast %116 : vector<8x1xf32> to vector<8x64xf32>
    %118 = arith.mulf %115, %117 : vector<8x64xf32>
    %119 = arith.addf %114, %118 : vector<8x64xf32>
    %120 = vector.extract_strided_slice %27 {offsets = [0, 512], sizes = [8, 64], strides = [1, 1]} : vector<8x576xf32> to vector<8x64xf32>
    %121 = vector.extract_strided_slice %77 {offsets = [0, 8], sizes = [8, 1], strides = [1, 1]} : vector<8x9xf32> to vector<8x1xf32>
    %122 = vector.broadcast %121 : vector<8x1xf32> to vector<8x64xf32>
    %123 = arith.mulf %120, %122 : vector<8x64xf32>
    %124 = arith.addf %119, %123 : vector<8x64xf32>
    %c0_22 = arith.constant 0 : index
    %c0_23 = arith.constant 0 : index
    %125 = vector.load %arg12[%c0_22, %c0_23] : memref<8x64xf32, #tpu.memory_space<vmem>>, vector<8x64xf32>
    tpu.vector_store %arg12[%c0_22, %c0_23], %124 {strides = array<i32>} : memref<8x64xf32, #tpu.memory_space<vmem>>, vector<8x64xf32>,
    %c0_24 = arith.constant 0 : index
    %c0_25 = arith.constant 0 : index
    %126 = vector.load %arg7[%c0_24, %c0_25] : memref<8x9xf32, #tpu.memory_space<vmem>>, vector<8x9xf32>
    %c0_26 = arith.constant 0 : index
    %c0_27 = arith.constant 0 : index
    %127 = vector.load %arg10[%c0_26, %c0_27] : memref<8x1xf32, #tpu.memory_space<vmem>>, vector<8x1xf32>
    %128 = vector.extract_strided_slice %27 {offsets = [0, 0], sizes = [8, 64], strides = [1, 1]} : vector<8x576xf32> to vector<8x64xf32>
    %129 = vector.extract_strided_slice %126 {offsets = [0, 0], sizes = [8, 1], strides = [1, 1]} : vector<8x9xf32> to vector<8x1xf32>
    %130 = vector.broadcast %129 : vector<8x1xf32> to vector<8x64xf32>
    %131 = arith.mulf %128, %130 : vector<8x64xf32>
    %132 = vector.broadcast %127 : vector<8x1xf32> to vector<8x64xf32>
    %133 = arith.addf %131, %132 : vector<8x64xf32>
    %134 = vector.extract_strided_slice %27 {offsets = [0, 64], sizes = [8, 64], strides = [1, 1]} : vector<8x576xf32> to vector<8x64xf32>
    %135 = vector.extract_strided_slice %126 {offsets = [0, 1], sizes = [8, 1], strides = [1, 1]} : vector<8x9xf32> to vector<8x1xf32>
    %136 = vector.broadcast %135 : vector<8x1xf32> to vector<8x64xf32>
    %137 = arith.mulf %134, %136 : vector<8x64xf32>
    %138 = arith.addf %133, %137 : vector<8x64xf32>
    %139 = vector.extract_strided_slice %27 {offsets = [0, 128], sizes = [8, 64], strides = [1, 1]} : vector<8x576xf32> to vector<8x64xf32>
    %140 = vector.extract_strided_slice %126 {offsets = [0, 2], sizes = [8, 1], strides = [1, 1]} : vector<8x9xf32> to vector<8x1xf32>
    %141 = vector.broadcast %140 : vector<8x1xf32> to vector<8x64xf32>
    %142 = arith.mulf %139, %141 : vector<8x64xf32>
    %143 = arith.addf %138, %142 : vector<8x64xf32>
    %144 = vector.extract_strided_slice %27 {offsets = [0, 192], sizes = [8, 64], strides = [1, 1]} : vector<8x576xf32> to vector<8x64xf32>
    %145 = vector.extract_strided_slice %126 {offsets = [0, 3], sizes = [8, 1], strides = [1, 1]} : vector<8x9xf32> to vector<8x1xf32>
    %146 = vector.broadcast %145 : vector<8x1xf32> to vector<8x64xf32>
    %147 = arith.mulf %144, %146 : vector<8x64xf32>
    %148 = arith.addf %143, %147 : vector<8x64xf32>
    %149 = vector.extract_strided_slice %27 {offsets = [0, 256], sizes = [8, 64], strides = [1, 1]} : vector<8x576xf32> to vector<8x64xf32>
    %150 = vector.extract_strided_slice %126 {offsets = [0, 4], sizes = [8, 1], strides = [1, 1]} : vector<8x9xf32> to vector<8x1xf32>
    %151 = vector.broadcast %150 : vector<8x1xf32> to vector<8x64xf32>
    %152 = arith.mulf %149, %151 : vector<8x64xf32>
    %153 = arith.addf %148, %152 : vector<8x64xf32>
    %154 = vector.extract_strided_slice %27 {offsets = [0, 320], sizes = [8, 64], strides = [1, 1]} : vector<8x576xf32> to vector<8x64xf32>
    %155 = vector.extract_strided_slice %126 {offsets = [0, 5], sizes = [8, 1], strides = [1, 1]} : vector<8x9xf32> to vector<8x1xf32>
    %156 = vector.broadcast %155 : vector<8x1xf32> to vector<8x64xf32>
    %157 = arith.mulf %154, %156 : vector<8x64xf32>
    %158 = arith.addf %153, %157 : vector<8x64xf32>
    %159 = vector.extract_strided_slice %27 {offsets = [0, 384], sizes = [8, 64], strides = [1, 1]} : vector<8x576xf32> to vector<8x64xf32>
    %160 = vector.extract_strided_slice %126 {offsets = [0, 6], sizes = [8, 1], strides = [1, 1]} : vector<8x9xf32> to vector<8x1xf32>
    %161 = vector.broadcast %160 : vector<8x1xf32> to vector<8x64xf32>
    %162 = arith.mulf %159, %161 : vector<8x64xf32>
    %163 = arith.addf %158, %162 : vector<8x64xf32>
    %164 = vector.extract_strided_slice %27 {offsets = [0, 448], sizes = [8, 64], strides = [1, 1]} : vector<8x576xf32> to vector<8x64xf32>
    %165 = vector.extract_strided_slice %126 {offsets = [0, 7], sizes = [8, 1], strides = [1, 1]} : vector<8x9xf32> to vector<8x1xf32>
    %166 = vector.broadcast %165 : vector<8x1xf32> to vector<8x64xf32>
    %167 = arith.mulf %164, %166 : vector<8x64xf32>
    %168 = arith.addf %163, %167 : vector<8x64xf32>
    %169 = vector.extract_strided_slice %27 {offsets = [0, 512], sizes = [8, 64], strides = [1, 1]} : vector<8x576xf32> to vector<8x64xf32>
    %170 = vector.extract_strided_slice %126 {offsets = [0, 8], sizes = [8, 1], strides = [1, 1]} : vector<8x9xf32> to vector<8x1xf32>
    %171 = vector.broadcast %170 : vector<8x1xf32> to vector<8x64xf32>
    %172 = arith.mulf %169, %171 : vector<8x64xf32>
    %173 = arith.addf %168, %172 : vector<8x64xf32>
    %c0_28 = arith.constant 0 : index
    %c0_29 = arith.constant 0 : index
    %174 = vector.load %arg13[%c0_28, %c0_29] : memref<8x64xf32, #tpu.memory_space<vmem>>, vector<8x64xf32>
    tpu.vector_store %arg13[%c0_28, %c0_29], %173 {strides = array<i32>} : memref<8x64xf32, #tpu.memory_space<vmem>>, vector<8x64xf32>,
    return
  }
  func.func @transform_0(%arg0: i32) -> (i32, i32) {
    %c0_i32 = arith.constant 0 : i32
    %c0_i32_0 = arith.constant 0 : i32
    return %arg0, %c0_i32 : i32, i32
  }
  func.func @transform_1(%arg0: i32) -> (i32, i32) {
    %c0_i32 = arith.constant 0 : i32
    %c0_i32_0 = arith.constant 0 : i32
    %c0_i32_1 = arith.constant 0 : i32
    return %c0_i32, %c0_i32_0 : i32, i32
  }
  func.func @transform_2(%arg0: i32) -> (i32, i32) {
    %c0_i32 = arith.constant 0 : i32
    %c0_i32_0 = arith.constant 0 : i32
    %c0_i32_1 = arith.constant 0 : i32
    return %c0_i32, %c0_i32_0 : i32, i32
  }
  func.func @transform_3(%arg0: i32) -> (i32, i32) {
    %c0_i32 = arith.constant 0 : i32
    %c0_i32_0 = arith.constant 0 : i32
    %c0_i32_1 = arith.constant 0 : i32
    return %c0_i32, %c0_i32_0 : i32, i32
  }
  func.func @transform_4(%arg0: i32) -> (i32, i32) {
    %c0_i32 = arith.constant 0 : i32
    %c0_i32_0 = arith.constant 0 : i32
    %c0_i32_1 = arith.constant 0 : i32
    return %c0_i32, %c0_i32_0 : i32, i32
  }
  func.func @transform_5(%arg0: i32) -> (i32, i32) {
    %c0_i32 = arith.constant 0 : i32
    %c0_i32_0 = arith.constant 0 : i32
    %c0_i32_1 = arith.constant 0 : i32
    return %c0_i32, %c0_i32_0 : i32, i32
  }
  func.func @transform_6(%arg0: i32) -> (i32, i32) {
    %c0_i32 = arith.constant 0 : i32
    %c0_i32_0 = arith.constant 0 : i32
    %c0_i32_1 = arith.constant 0 : i32
    return %c0_i32, %c0_i32_0 : i32, i32
  }
  func.func @transform_7(%arg0: i32) -> (i32, i32) {
    %c0_i32 = arith.constant 0 : i32
    %c0_i32_0 = arith.constant 0 : i32
    %c0_i32_1 = arith.constant 0 : i32
    return %c0_i32, %c0_i32_0 : i32, i32
  }
  func.func @transform_8(%arg0: i32) -> (i32, i32) {
    %c0_i32 = arith.constant 0 : i32
    %c0_i32_0 = arith.constant 0 : i32
    %c0_i32_1 = arith.constant 0 : i32
    return %c0_i32, %c0_i32_0 : i32, i32
  }
  func.func @transform_9(%arg0: i32) -> (i32, i32) {
    %c0_i32 = arith.constant 0 : i32
    %c0_i32_0 = arith.constant 0 : i32
    %c0_i32_1 = arith.constant 0 : i32
    return %c0_i32, %c0_i32_0 : i32, i32
  }
  func.func @transform_10(%arg0: i32) -> (i32, i32) {
    %c0_i32 = arith.constant 0 : i32
    %c0_i32_0 = arith.constant 0 : i32
    return %arg0, %c0_i32 : i32, i32
  }
  func.func @transform_11(%arg0: i32) -> (i32, i32) {
    %c0_i32 = arith.constant 0 : i32
    %c0_i32_0 = arith.constant 0 : i32
    return %arg0, %c0_i32 : i32, i32
  }
  func.func @transform_12(%arg0: i32) -> (i32, i32) {
    %c0_i32 = arith.constant 0 : i32
    %c0_i32_0 = arith.constant 0 : i32
    return %arg0, %c0_i32 : i32, i32
  }
}

</mosaic_0001>

<llo_original>
// kernel: tpu_custom_call.1
$region0: #{tpu_custom_call.1}
  #allocation0 [shape = 'u32[]', space=smem, size = 0x4, offset = 0x4, fixed_abs, tag = 'smem constant byte address 0x4 - core index']
  #allocation1 [shape = 'u32[144,128]{1,0:T(1,128)}', space=vmem, size = 0x12000, scoped, tag = 'internal scratch']
  %s0 = inlined_call_operand.vmem [shape: f32[16,64], index: 0, kind: input, shape index: {}]
  %s1 = inlined_call_operand.hbm [shape: f32[1,64], index: 1, kind: input, shape index: {}]
  %s2 = inlined_call_operand.hbm [shape: f32[1,64], index: 2, kind: input, shape index: {}]
  %s3 = inlined_call_operand.hbm [shape: bf16[64,576], index: 3, kind: input, shape index: {}]
  %s4 = inlined_call_operand.vmem [shape: f32[8,9], index: 4, kind: input, shape index: {}]
  %s5 = inlined_call_operand.vmem [shape: f32[8,9], index: 5, kind: input, shape index: {}]
  %s6 = inlined_call_operand.hbm [shape: f32[8,9], index: 6, kind: input, shape index: {}]
  %s7 = inlined_call_operand.vmem [shape: f32[8,1], index: 7, kind: input, shape index: {}]
  %s8 = inlined_call_operand.vmem [shape: f32[8,1], index: 8, kind: input, shape index: {}]
  %s9 = inlined_call_operand.vmem [shape: f32[8,1], index: 9, kind: input, shape index: {}]
  %s10 = inlined_call_operand.hbm [shape: f32[16,64], index: 10, kind: output, shape index: {0}]
  %s11 = inlined_call_operand.hbm [shape: f32[16,64], index: 11, kind: output, shape index: {1}]
  %s12 = inlined_call_operand.hbm [shape: f32[16,64], index: 12, kind: output, shape index: {2}]
  %13 = xla_tuple %s10, %s11, %s12
  %s14 = sld [smem:[#allocation0]]
  $region105: #{tpu_custom_call.1} parent=0
    _
  %s16 = ssub.s32 1, %s14
  %s17 = scalar_select 0, %s16, %s14
  $region1: #{tpu_custom_call.1} parent=0
    #allocation2 [shape = 'u8[512]{0}', space=vmem, size = 0x400, scoped, tag = 'input window, operand 1, single buffered']
    #allocation3 [shape = 's32[2]{0}', space=sflag, size = 0x8, scoped, tag = 'scoped memory for tpu_custom_call.1']
    #allocation4 [shape = 's32[2]{0}', space=sflag, size = 0x8, scoped, tag = 'scoped memory for tpu_custom_call.1']
    #allocation5 [shape = 'u8[512]{0}', space=vmem, size = 0x400, scoped, tag = 'input window, operand 2, single buffered']
    #allocation6 [shape = 's32[1]{0}', space=sflag, size = 0x4, scoped, tag = 'scoped memory for tpu_custom_call.1']
    #allocation7 [shape = 'u8[81920]{0}', space=vmem, size = 0x14000, scoped, tag = 'input window, operand 3, single buffered']
    #allocation8 [shape = 'u8[4096]{0}', space=vmem, size = 0x1000, scoped, tag = 'input window, operand 6, single buffered']
    #allocation9 [shape = 's32[1]{0}', space=sflag, size = 0x4, scoped, tag = 'scoped memory for tpu_custom_call.1']
    #allocation10 [shape = 'u8[8192]{0}', space=vmem, size = 0x2000, scoped, tag = 'output window, operand 0']
    #allocation11 [shape = 'u8[8192]{0}', space=vmem, size = 0x2000, scoped, tag = 'output window, operand 1']
    #allocation12 [shape = 's32[2]{0}', space=sflag, size = 0x8, scoped, tag = 'scoped memory for tpu_custom_call.1']
    #allocation13 [shape = 'u8[8192]{0}', space=vmem, size = 0x2000, scoped, tag = 'output window, operand 2']
    %18 = vsyncpa [#allocation3], 0
    %19 = vsyncpa [#allocation6], 0
    %20 = vsyncpa [#allocation9], 0
    %21 = vsyncpa [#allocation4], 0
    %s22 = scalar_lea.sflag [#allocation4], 1
    %23 = vsyncpa %s22, 0
    %24 = vsyncpa [#allocation12], 0
    %s25 = scalar_lea.sflag [#allocation12], 1
    %26 = vsyncpa %s25, 0
    loop: start=0, step=1, limit=4
    $region2: #{tpu_custom_call.1} parent=1 // loop_pre_header
      _
    $region3: #{tpu_custom_call.1} parent=1 // loop_header
      %s28 = sphi 0, %s32
      %p29 = scmp.ge.s32.totalorder %s28, 4
      %s38 = sphi 0, %s40
      %s41 = sphi 0, %s38
      %s42 = sphi 0, %s41
      %s58 = sphi 0, %s42
      %s62 = sphi 0, %s62
      %s64 = sphi 0, %s62
      %s65 = sphi 0, %s64
      %s79 = sphi 0, %s65
      %s83 = sphi 0, %s83
      %s85 = sphi 0, %s83
      %s86 = sphi 0, %s85
      %s100 = sphi 0, %s86
      %s104 = sphi 0, %s104
      %s106 = sphi 0, %s104
      %s107 = sphi 0, %s106
      %s121 = sphi 0, %s107
      %s125 = sphi 0, %s125
      %s127 = sphi 0, %s125
      %s128 = sphi 0, %s127
      %s142 = sphi 0, %s128
      %s146 = sphi 0, %s146
      %s148 = sphi 0, %s146
      %s149 = sphi 0, %s148
      %s163 = sphi 0, %s149
      %s167 = sphi 0, %s167
      %s169 = sphi 0, %s167
      %s170 = sphi 0, %s169
      %s184 = sphi 0, %s170
      %s188 = sphi 0, %s188
      %s190 = sphi 0, %s188
      %s191 = sphi 0, %s190
      %s205 = sphi 0, %s191
      %s209 = sphi 0, %s209
      %s211 = sphi 0, %s209
      %s212 = sphi 0, %s211
      %s226 = sphi 0, %s212
      %s230 = sphi 0, %s230
      %s232 = sphi 0, %s230
      %s233 = sphi 0, %s232
      %s247 = sphi 0, %s233
      %s253 = sphi 0, %s255
      %s256 = sphi 0, %s253
      %s257 = sphi 0, %s256
      %s273 = sphi 0, %s257
      %s279 = sphi 0, %s281
      %s282 = sphi 0, %s279
      %s283 = sphi 0, %s282
      %s299 = sphi 0, %s283
      %s305 = sphi 0, %s307
      %s308 = sphi 0, %s305
      %s309 = sphi 0, %s308
      %s325 = sphi 0, %s309
    $region4: #{tpu_custom_call.1} parent=1 // loop_header_branch
      %31 = sbr.rel (%p29) target = $region8
    $region5: #{tpu_custom_call.1} parent=1 // loop_body
      %s33 = ssub.s32 %s28, 1
      %s34 = ssub.s32 %s28, 2
      %s35 = sadd.s32 %s28, 1
      %s36 = ssub.s32 %s28, %s35
      %p37 = scmp.eq.s32.totalorder %s36, 0
      %s39 = sadd.s32 %s38, 1
      %s40 = scalar_select %p37, %s38, %s39
      %p43 = pneg %p37
      %p44 = scmp.eq.s32.totalorder %s28, 1
      %p45 = por %p43, %p44
      %p46 = scmp.ne.s32.totalorder %s38, %s41
      %p47 = scmp.eq.s32.totalorder %s28, 0
      %p48 = por %p46, %p47
      %p49 = scmp.ne.s32.totalorder %s38, %s41
      %p50 = scmp.eq.s32.totalorder %s33, 1
      %p51 = por %p49, %p50
      %p52 = scmp.ne.s32.totalorder %s41, %s42
      %p53 = scmp.eq.s32.totalorder %s33, 0
      %p54 = por %p52, %p53
      %p55 = scmp.ne.s32.totalorder %s41, %s42
      %p56 = scmp.eq.s32.totalorder %s34, 1
      %p57 = por %p55, %p56
      %p59 = scmp.ne.s32.totalorder %s42, %s58
      %p60 = scmp.eq.s32.totalorder %s34, 0
      %p61 = por %p59, %p60
      %s63 = sadd.s32 %s62, 1
      %p66 = scmp.eq.s32.totalorder %s28, 1
      %p67 = scmp.ne.s32.totalorder %s62, %s64
      %p68 = scmp.eq.s32.totalorder %s28, 0
      %p69 = por %p67, %p68
      %p70 = scmp.ne.s32.totalorder %s62, %s64
      %p71 = scmp.eq.s32.totalorder %s33, 1
      %p72 = por %p70, %p71
      %p73 = scmp.ne.s32.totalorder %s64, %s65
      %p74 = scmp.eq.s32.totalorder %s33, 0
      %p75 = por %p73, %p74
      %p76 = scmp.ne.s32.totalorder %s64, %s65
      %p77 = scmp.eq.s32.totalorder %s34, 1
      %p78 = por %p76, %p77
      %p80 = scmp.ne.s32.totalorder %s65, %s79
      %p81 = scmp.eq.s32.totalorder %s34, 0
      %p82 = por %p80, %p81
      %s84 = sadd.s32 %s83, 1
      %p87 = scmp.eq.s32.totalorder %s28, 1
      %p88 = scmp.ne.s32.totalorder %s83, %s85
      %p89 = scmp.eq.s32.totalorder %s28, 0
      %p90 = por %p88, %p89
      %p91 = scmp.ne.s32.totalorder %s83, %s85
      %p92 = scmp.eq.s32.totalorder %s33, 1
      %p93 = por %p91, %p92
      %p94 = scmp.ne.s32.totalorder %s85, %s86
      %p95 = scmp.eq.s32.totalorder %s33, 0
      %p96 = por %p94, %p95
      %p97 = scmp.ne.s32.totalorder %s85, %s86
      %p98 = scmp.eq.s32.totalorder %s34, 1
      %p99 = por %p97, %p98
      %p101 = scmp.ne.s32.totalorder %s86, %s100
      %p102 = scmp.eq.s32.totalorder %s34, 0
      %p103 = por %p101, %p102
      %s105 = sadd.s32 %s104, 1
      %p108 = scmp.eq.s32.totalorder %s28, 1
      %p109 = scmp.ne.s32.totalorder %s104, %s106
      %p110 = scmp.eq.s32.totalorder %s28, 0
      %p111 = por %p109, %p110
      %p112 = scmp.ne.s32.totalorder %s104, %s106
      %p113 = scmp.eq.s32.totalorder %s33, 1
      %p114 = por %p112, %p113
      %p115 = scmp.ne.s32.totalorder %s106, %s107
      %p116 = scmp.eq.s32.totalorder %s33, 0
      %p117 = por %p115, %p116
      %p118 = scmp.ne.s32.totalorder %s106, %s107
      %p119 = scmp.eq.s32.totalorder %s34, 1
      %p120 = por %p118, %p119
      %p122 = scmp.ne.s32.totalorder %s107, %s121
      %p123 = scmp.eq.s32.totalorder %s34, 0
      %p124 = por %p122, %p123
      %s126 = sadd.s32 %s125, 1
      %p129 = scmp.eq.s32.totalorder %s28, 1
      %p130 = scmp.ne.s32.totalorder %s125, %s127
      %p131 = scmp.eq.s32.totalorder %s28, 0
      %p132 = por %p130, %p131
      %p133 = scmp.ne.s32.totalorder %s125, %s127
      %p134 = scmp.eq.s32.totalorder %s33, 1
      %p135 = por %p133, %p134
      %p136 = scmp.ne.s32.totalorder %s127, %s128
      %p137 = scmp.eq.s32.totalorder %s33, 0
      %p138 = por %p136, %p137
      %p139 = scmp.ne.s32.totalorder %s127, %s128
      %p140 = scmp.eq.s32.totalorder %s34, 1
      %p141 = por %p139, %p140
      %p143 = scmp.ne.s32.totalorder %s128, %s142
      %p144 = scmp.eq.s32.totalorder %s34, 0
      %p145 = por %p143, %p144
      %s147 = sadd.s32 %s146, 1
      %p150 = scmp.eq.s32.totalorder %s28, 1
      %p151 = scmp.ne.s32.totalorder %s146, %s148
      %p152 = scmp.eq.s32.totalorder %s28, 0
      %p153 = por %p151, %p152
      %p154 = scmp.ne.s32.totalorder %s146, %s148
      %p155 = scmp.eq.s32.totalorder %s33, 1
      %p156 = por %p154, %p155
      %p157 = scmp.ne.s32.totalorder %s148, %s149
      %p158 = scmp.eq.s32.totalorder %s33, 0
      %p159 = por %p157, %p158
      %p160 = scmp.ne.s32.totalorder %s148, %s149
      %p161 = scmp.eq.s32.totalorder %s34, 1
      %p162 = por %p160, %p161
      %p164 = scmp.ne.s32.totalorder %s149, %s163
      %p165 = scmp.eq.s32.totalorder %s34, 0
      %p166 = por %p164, %p165
      %s168 = sadd.s32 %s167, 1
      %p171 = scmp.eq.s32.totalorder %s28, 1
      %p172 = scmp.ne.s32.totalorder %s167, %s169
      %p173 = scmp.eq.s32.totalorder %s28, 0
      %p174 = por %p172, %p173
      %p175 = scmp.ne.s32.totalorder %s167, %s169
      %p176 = scmp.eq.s32.totalorder %s33, 1
      %p177 = por %p175, %p176
      %p178 = scmp.ne.s32.totalorder %s169, %s170
      %p179 = scmp.eq.s32.totalorder %s33, 0
      %p180 = por %p178, %p179
      %p181 = scmp.ne.s32.totalorder %s169, %s170
      %p182 = scmp.eq.s32.totalorder %s34, 1
      %p183 = por %p181, %p182
      %p185 = scmp.ne.s32.totalorder %s170, %s184
      %p186 = scmp.eq.s32.totalorder %s34, 0
      %p187 = por %p185, %p186
      %s189 = sadd.s32 %s188, 1
      %p192 = scmp.eq.s32.totalorder %s28, 1
      %p193 = scmp.ne.s32.totalorder %s188, %s190
      %p194 = scmp.eq.s32.totalorder %s28, 0
      %p195 = por %p193, %p194
      %p196 = scmp.ne.s32.totalorder %s188, %s190
      %p197 = scmp.eq.s32.totalorder %s33, 1
      %p198 = por %p196, %p197
      %p199 = scmp.ne.s32.totalorder %s190, %s191
      %p200 = scmp.eq.s32.totalorder %s33, 0
      %p201 = por %p199, %p200
      %p202 = scmp.ne.s32.totalorder %s190, %s191
      %p203 = scmp.eq.s32.totalorder %s34, 1
      %p204 = por %p202, %p203
      %p206 = scmp.ne.s32.totalorder %s191, %s205
      %p207 = scmp.eq.s32.totalorder %s34, 0
      %p208 = por %p206, %p207
      %s210 = sadd.s32 %s209, 1
      %p213 = scmp.eq.s32.totalorder %s28, 1
      %p214 = scmp.ne.s32.totalorder %s209, %s211
      %p215 = scmp.eq.s32.totalorder %s28, 0
      %p216 = por %p214, %p215
      %p217 = scmp.ne.s32.totalorder %s209, %s211
      %p218 = scmp.eq.s32.totalorder %s33, 1
      %p219 = por %p217, %p218
      %p220 = scmp.ne.s32.totalorder %s211, %s212
      %p221 = scmp.eq.s32.totalorder %s33, 0
      %p222 = por %p220, %p221
      %p223 = scmp.ne.s32.totalorder %s211, %s212
      %p224 = scmp.eq.s32.totalorder %s34, 1
      %p225 = por %p223, %p224
      %p227 = scmp.ne.s32.totalorder %s212, %s226
      %p228 = scmp.eq.s32.totalorder %s34, 0
      %p229 = por %p227, %p228
      %s231 = sadd.s32 %s230, 1
      %p234 = scmp.eq.s32.totalorder %s28, 1
      %p235 = scmp.ne.s32.totalorder %s230, %s232
      %p236 = scmp.eq.s32.totalorder %s28, 0
      %p237 = por %p235, %p236
      %p238 = scmp.ne.s32.totalorder %s230, %s232
      %p239 = scmp.eq.s32.totalorder %s33, 1
      %p240 = por %p238, %p239
      %p241 = scmp.ne.s32.totalorder %s232, %s233
      %p242 = scmp.eq.s32.totalorder %s33, 0
      %p243 = por %p241, %p242
      %p244 = scmp.ne.s32.totalorder %s232, %s233
      %p245 = scmp.eq.s32.totalorder %s34, 1
      %p246 = por %p244, %p245
      %p248 = scmp.ne.s32.totalorder %s233, %s247
      %p249 = scmp.eq.s32.totalorder %s34, 0
      %p250 = por %p248, %p249
      %s251 = ssub.s32 %s28, %s35
      %p252 = scmp.eq.s32.totalorder %s251, 0
      %s254 = sadd.s32 %s253, 1
      %s255 = scalar_select %p252, %s253, %s254
      %p258 = pneg %p252
      %p259 = scmp.eq.s32.totalorder %s28, 1
      %p260 = por %p258, %p259
      %p261 = scmp.ne.s32.totalorder %s253, %s256
      %p262 = scmp.eq.s32.totalorder %s28, 0
      %p263 = por %p261, %p262
      %p264 = scmp.ne.s32.totalorder %s253, %s256
      %p265 = scmp.eq.s32.totalorder %s33, 1
      %p266 = por %p264, %p265
      %p267 = scmp.ne.s32.totalorder %s256, %s257
      %p268 = scmp.eq.s32.totalorder %s33, 0
      %p269 = por %p267, %p268
      %p270 = scmp.ne.s32.totalorder %s256, %s257
      %p271 = scmp.eq.s32.totalorder %s34, 1
      %p272 = por %p270, %p271
      %p274 = scmp.ne.s32.totalorder %s257, %s273
      %p275 = scmp.eq.s32.totalorder %s34, 0
      %p276 = por %p274, %p275
      %s277 = ssub.s32 %s28, %s35
      %p278 = scmp.eq.s32.totalorder %s277, 0
      %s280 = sadd.s32 %s279, 1
      %s281 = scalar_select %p278, %s279, %s280
      %p284 = pneg %p278
      %p285 = scmp.eq.s32.totalorder %s28, 1
      %p286 = por %p284, %p285
      %p287 = scmp.ne.s32.totalorder %s279, %s282
      %p288 = scmp.eq.s32.totalorder %s28, 0
      %p289 = por %p287, %p288
      %p290 = scmp.ne.s32.totalorder %s279, %s282
      %p291 = scmp.eq.s32.totalorder %s33, 1
      %p292 = por %p290, %p291
      %p293 = scmp.ne.s32.totalorder %s282, %s283
      %p294 = scmp.eq.s32.totalorder %s33, 0
      %p295 = por %p293, %p294
      %p296 = scmp.ne.s32.totalorder %s282, %s283
      %p297 = scmp.eq.s32.totalorder %s34, 1
      %p298 = por %p296, %p297
      %p300 = scmp.ne.s32.totalorder %s283, %s299
      %p301 = scmp.eq.s32.totalorder %s34, 0
      %p302 = por %p300, %p301
      %s303 = ssub.s32 %s28, %s35
      %p304 = scmp.eq.s32.totalorder %s303, 0
      %s306 = sadd.s32 %s305, 1
      %s307 = scalar_select %p304, %s305, %s306
      %p310 = pneg %p304
      %p311 = scmp.eq.s32.totalorder %s28, 1
      %p312 = por %p310, %p311
      %p313 = scmp.ne.s32.totalorder %s305, %s308
      %p314 = scmp.eq.s32.totalorder %s28, 0
      %p315 = por %p313, %p314
      %p316 = scmp.ne.s32.totalorder %s305, %s308
      %p317 = scmp.eq.s32.totalorder %s33, 1
      %p318 = por %p316, %p317
      %p319 = scmp.ne.s32.totalorder %s308, %s309
      %p320 = scmp.eq.s32.totalorder %s33, 0
      %p321 = por %p319, %p320
      %p322 = scmp.ne.s32.totalorder %s308, %s309
      %p323 = scmp.eq.s32.totalorder %s34, 1
      %p324 = por %p322, %p323
      %p326 = scmp.ne.s32.totalorder %s309, %s325
      %p327 = scmp.eq.s32.totalorder %s34, 0
      %p328 = por %p326, %p327
      %p329 = scmp.le.s32.totalorder 1, %s28
      %p330 = scmp.lt.s32.totalorder %s28, 3
      %p331 = pnand %p329, %p330
      %p332 = pneg %p331
      // Predicated region
      $region9: #{tpu_custom_call.1} parent=5 // pred_check
        _
      $region10: #{tpu_custom_call.1} parent=5 // pred_check_branch
        %334 = sbr.rel (%p331) target = $region12
      $region11: #{tpu_custom_call.1} parent=5 // pred_region
        %s335 = ssub.s32 %s28, 1
        // Predicated region
        $region13: #{tpu_custom_call.1} parent=11 // pred_check
          %p336 = pneg %p75
        $region14: #{tpu_custom_call.1} parent=11 // pred_check_branch
          %338 = sbr.rel (%p336) target = $region16
        $region15: #{tpu_custom_call.1} parent=11 // pred_region
          %s340 = ssub.s32 16, 16
          %341 = vsyncadd [#allocation3], %s340
          %s343 = sshll.u32 [#allocation2], 4
          %s344 = int_to_ptr.vmem [resolvable:$true] %s343
          %346 = dma.hbm_to_vmem [thread:$0]  %s1, 16, %s344, [#allocation3]
        $region16: #{tpu_custom_call.1} parent=11 // pred_fallthru
          _
        // Predicated region
        $region17: #{tpu_custom_call.1} parent=11 // pred_check
          %p347 = pneg %p96
        $region18: #{tpu_custom_call.1} parent=11 // pred_check_branch
          %349 = sbr.rel (%p347) target = $region20
        $region19: #{tpu_custom_call.1} parent=11 // pred_region
          %s351 = ssub.s32 16, 16
          %352 = vsyncadd [#allocation6], %s351
          %s354 = sshll.u32 [#allocation5], 4
          %s355 = int_to_ptr.vmem [resolvable:$true] %s354
          %357 = dma.hbm_to_vmem [thread:$0]  %s2, 16, %s355, [#allocation6]
        $region20: #{tpu_custom_call.1} parent=11 // pred_fallthru
          _
        // Predicated region
        $region21: #{tpu_custom_call.1} parent=11 // pred_check
          %p358 = pneg %p117
        $region22: #{tpu_custom_call.1} parent=11 // pred_check_branch
          %360 = sbr.rel (%p358) target = $region24
        $region23: #{tpu_custom_call.1} parent=11 // pred_region
          %s362 = ssub.s32 2560, 2560
          %363 = vsyncadd [#allocation6], %s362
          %s364 = sshll.u32 [#allocation7], 4
          %s365 = int_to_ptr.vmem [resolvable:$true] %s364
          %370 = dma.hbm_to_vmem [thread:$0]  %s3, 2560, %s365, [#allocation6], 320, 320, 20
        $region24: #{tpu_custom_call.1} parent=11 // pred_fallthru
          _
        // Predicated region
        $region25: #{tpu_custom_call.1} parent=11 // pred_check
          %p371 = pneg %p138
        $region26: #{tpu_custom_call.1} parent=11 // pred_check_branch
          %373 = sbr.rel (%p371) target = $region28
        $region27: #{tpu_custom_call.1} parent=11 // pred_region
          _
        $region28: #{tpu_custom_call.1} parent=11 // pred_fallthru
          _
        // Predicated region
        $region29: #{tpu_custom_call.1} parent=11 // pred_check
          %p374 = pneg %p159
        $region30: #{tpu_custom_call.1} parent=11 // pred_check_branch
          %376 = sbr.rel (%p374) target = $region32
        $region31: #{tpu_custom_call.1} parent=11 // pred_region
          _
        $region32: #{tpu_custom_call.1} parent=11 // pred_fallthru
          _
        // Predicated region
        $region33: #{tpu_custom_call.1} parent=11 // pred_check
          %p377 = pneg %p180
        $region34: #{tpu_custom_call.1} parent=11 // pred_check_branch
          %379 = sbr.rel (%p377) target = $region36
        $region35: #{tpu_custom_call.1} parent=11 // pred_region
          %s381 = ssub.s32 128, 128
          %382 = vsyncadd [#allocation9], %s381
          %s384 = sshll.u32 [#allocation8], 4
          %s385 = int_to_ptr.vmem [resolvable:$true] %s384
          %387 = dma.hbm_to_vmem [thread:$0]  %s6, 128, %s385, [#allocation9]
        $region36: #{tpu_custom_call.1} parent=11 // pred_fallthru
          _
        // Predicated region
        $region37: #{tpu_custom_call.1} parent=11 // pred_check
          %p388 = pneg %p201
        $region38: #{tpu_custom_call.1} parent=11 // pred_check_branch
          %390 = sbr.rel (%p388) target = $region40
        $region39: #{tpu_custom_call.1} parent=11 // pred_region
          _
        $region40: #{tpu_custom_call.1} parent=11 // pred_fallthru
          _
        // Predicated region
        $region41: #{tpu_custom_call.1} parent=11 // pred_check
          %p391 = pneg %p222
        $region42: #{tpu_custom_call.1} parent=11 // pred_check_branch
          %393 = sbr.rel (%p391) target = $region44
        $region43: #{tpu_custom_call.1} parent=11 // pred_region
          _
        $region44: #{tpu_custom_call.1} parent=11 // pred_fallthru
          _
        // Predicated region
        $region45: #{tpu_custom_call.1} parent=11 // pred_check
          %p394 = pneg %p243
        $region46: #{tpu_custom_call.1} parent=11 // pred_check_branch
          %396 = sbr.rel (%p394) target = $region48
        $region47: #{tpu_custom_call.1} parent=11 // pred_region
          _
        $region48: #{tpu_custom_call.1} parent=11 // pred_fallthru
          _
      $region12: #{tpu_custom_call.1} parent=5 // pred_fallthru
        _
      %p397 = scmp.lt.s32.totalorder %s28, 2
      // Predicated region
      $region49: #{tpu_custom_call.1} parent=5 // pred_check
        %p398 = pneg %p397
      $region50: #{tpu_custom_call.1} parent=5 // pred_check_branch
        %400 = sbr.rel (%p398) target = $region52
      $region51: #{tpu_custom_call.1} parent=5 // pred_region
        // Predicated region
        $region53: #{tpu_custom_call.1} parent=51 // pred_check
          %p401 = pneg %p48
        $region54: #{tpu_custom_call.1} parent=51 // pred_check_branch
          %403 = sbr.rel (%p401) target = $region56
        $region55: #{tpu_custom_call.1} parent=51 // pred_region
          %p404 = scmp.lt.s32.totalorder %s28, 1
          %s405 = scalar_select %p404, %s28, 1
          %s406 = smul.addr %s405, 8
          %s407 = scalar_lea.vmem %s0, %s406
        $region56: #{tpu_custom_call.1} parent=51 // pred_fallthru
          _
      $region52: #{tpu_custom_call.1} parent=5 // pred_fallthru
        _
      %p408 = scmp.le.s32.totalorder 1, %s28
      %p409 = scmp.lt.s32.totalorder %s28, 3
      %p410 = pnand %p408, %p409
      %p411 = pneg %p410
      // Predicated region
      $region57: #{tpu_custom_call.1} parent=5 // pred_check
        _
      $region58: #{tpu_custom_call.1} parent=5 // pred_check_branch
        %413 = sbr.rel (%p410) target = $region60
      $region59: #{tpu_custom_call.1} parent=5 // pred_region
        %s414 = ssub.s32 %s28, 1
        // Predicated region
        $region61: #{tpu_custom_call.1} parent=59 // pred_check
          %p415 = pneg %p75
        $region62: #{tpu_custom_call.1} parent=59 // pred_check_branch
          %417 = sbr.rel (%p415) target = $region64
        $region63: #{tpu_custom_call.1} parent=59 // pred_region
          %418 = dma.done [#allocation3], 16
        $region64: #{tpu_custom_call.1} parent=59 // pred_fallthru
          _
        // Predicated region
        $region65: #{tpu_custom_call.1} parent=59 // pred_check
          %p419 = pneg %p96
        $region66: #{tpu_custom_call.1} parent=59 // pred_check_branch
          %421 = sbr.rel (%p419) target = $region68
        $region67: #{tpu_custom_call.1} parent=59 // pred_region
          %422 = dma.done [#allocation6], 16
        $region68: #{tpu_custom_call.1} parent=59 // pred_fallthru
          _
        // Predicated region
        $region69: #{tpu_custom_call.1} parent=59 // pred_check
          %p423 = pneg %p117
        $region70: #{tpu_custom_call.1} parent=59 // pred_check_branch
          %425 = sbr.rel (%p423) target = $region72
        $region71: #{tpu_custom_call.1} parent=59 // pred_region
          %426 = dma.done [#allocation6], 2560
        $region72: #{tpu_custom_call.1} parent=59 // pred_fallthru
          _
        // Predicated region
        $region73: #{tpu_custom_call.1} parent=59 // pred_check
          %p427 = pneg %p180
        $region74: #{tpu_custom_call.1} parent=59 // pred_check_branch
          %429 = sbr.rel (%p427) target = $region76
        $region75: #{tpu_custom_call.1} parent=59 // pred_region
          %430 = dma.done [#allocation9], 128
        $region76: #{tpu_custom_call.1} parent=59 // pred_fallthru
          _
        %p431 = scmp.lt.s32.totalorder %s33, 1
        %s432 = scalar_select %p431, %s33, 1
        %s433 = smul.addr %s432, 8
        %s434 = scalar_lea.vmem %s0, %s433
        %p435 = pneg %p54
        %p436 = pneg %p51
        %p437 = pneg %p75
        %p438 = pneg %p72
        %p439 = pneg %p96
        %p440 = pneg %p93
        %p441 = pneg %p117
        %p442 = pneg %p114
        %p443 = pneg %p138
        %p444 = pneg %p135
        %p445 = pneg %p159
        %p446 = pneg %p156
        %p447 = pneg %p180
        %p448 = pneg %p177
        %p449 = pneg %p201
        %p450 = pneg %p198
        %p451 = pneg %p222
        %p452 = pneg %p219
        %p453 = pneg %p243
        %p454 = pneg %p240
        %p455 = pneg %p269
        %p456 = pneg %p266
        %s457 = sand.u32 %s256, 1
        %s458 = scalar_lea.sflag [#allocation4], %s457
        %s459 = sand.u32 %s256, 1
        %s460 = smul.addr %s459, 8
        %s461 = scalar_lea.vmem [#allocation10], %s460
        %p462 = pneg %p295
        %p463 = pneg %p292
        %s464 = sand.u32 %s33, 1
        %s465 = scalar_lea.sflag [#allocation12], %s464
        %s466 = sand.u32 %s282, 1
        %s467 = smul.addr %s466, 8
        %s468 = scalar_lea.vmem [#allocation11], %s467
        %p469 = pneg %p321
        %p470 = pneg %p318
        %s471 = sand.u32 %s33, 1
        %s472 = scalar_lea.sflag [#allocation12], %s471
        %s473 = sand.u32 %s308, 1
        %s474 = smul.addr %s473, 8
        %s475 = scalar_lea.vmem [#allocation13], %s474
        %p476 = scmp.lt.s32.totalorder %s33, 1
        %s477 = scalar_select %p476, %s33, 1
        %s478 = smul.addr %s477, 8
        %s479 = scalar_lea.vmem %s0, %s478
        %v481 = vld [vmem:[%s479] sm:$0xff]
        %v482 = vld [vmem:[#allocation2] sm:$0x1]
        %v483 = vld [vmem:[#allocation5] sm:$0x1]
        %vm484 = vcmask 523264
        %v485 = vsel %vm484, %v481, 0.0
        %486 = vadd.xlane.f32.xlu0 %v485
        %v487 = vpop.xlane.xlu0 %486
        %v488 = vrcp.pop 64.0
        %v489 = vmul.f32 %v487, %v488
        %v490 = vsub.f32 %v481, %v489
        %v491 = vmul.f32 %v490, %v490
        %v492 = vsel %vm484, %v491, 0.0
        %493 = vadd.xlane.f32.xlu0 %v492
        %v494 = vpop.xlane.xlu0 %493
        %v495 = vmul.f32 %v494, %v488
        %v496 = vadd.f32 %v495, 1e-05
        %v497 = vrsqrt.pop %v496
        %v498 = vmul.f32 %v490, %v497
        %v500 = vlaneseq
        %v501 = vshrl.u32 %v500, 7
        %v502 = vsub.s32 0, %v501
        %v503 = vrot.slane %v482, %v502
        %v505 = vmul.f32 %v498, %v503
        %v507 = vlaneseq
        %v508 = vshrl.u32 %v507, 7
        %v509 = vsub.s32 0, %v508
        %v510 = vrot.slane %v483, %v509
        %v512 = vadd.f32 %v505, %v510
        %v513 = vpack.c.bf16 %v512, %v512
        %v514 = vld [vmem:[#allocation7] sm:$0xff]
        %v515 = vld [vmem:[#allocation7 + $0x8] sm:$0xff]
        %v516 = vld [vmem:[#allocation7 + $0x10] sm:$0xf]
        %v517 = vld [vmem:[#allocation7 + $0x14] sm:$0xff]
        %v518 = vld [vmem:[#allocation7 + $0x1c] sm:$0xff]
        %v519 = vld [vmem:[#allocation7 + $0x24] sm:$0xf]
        %v520 = vld [vmem:[#allocation7 + $0x28] sm:$0xff]
        %v521 = vld [vmem:[#allocation7 + $0x30] sm:$0xff]
        %v522 = vld [vmem:[#allocation7 + $0x38] sm:$0xf]
        %v523 = vld [vmem:[#allocation7 + $0x3c] sm:$0xff]
        %v524 = vld [vmem:[#allocation7 + $0x44] sm:$0xff]
        %v525 = vld [vmem:[#allocation7 + $0x4c] sm:$0xf]
        %v526 = vld [vmem:[#allocation7 + $0x50] sm:$0xff]
        %v527 = vld [vmem:[#allocation7 + $0x58] sm:$0xff]
        %v528 = vld [vmem:[#allocation7 + $0x60] sm:$0xf]
        %v529 = vld [vmem:[#allocation7 + $0x64] sm:$0xff]
        %v530 = vld [vmem:[#allocation7 + $0x6c] sm:$0xff]
        %v531 = vld [vmem:[#allocation7 + $0x74] sm:$0xf]
        %v532 = vld [vmem:[#allocation7 + $0x78] sm:$0xff]
        %v533 = vld [vmem:[#allocation7 + $0x80] sm:$0xff]
        %v534 = vld [vmem:[#allocation7 + $0x88] sm:$0xf]
        %v535 = vld [vmem:[#allocation7 + $0x8c] sm:$0xff]
        %v536 = vld [vmem:[#allocation7 + $0x94] sm:$0xff]
        %v537 = vld [vmem:[#allocation7 + $0x9c] sm:$0xf]
        %v562 = vunpack.c.l.b16 %v514
        %v563 = vunpack.c.h.b16 %v514
        %v564 = vunpack.c.l.b16 %v515
        %v565 = vunpack.c.h.b16 %v515
        %v566 = vunpack.c.l.b16 %v516
        %v567 = vunpack.c.l.b16 %v517
        %v568 = vunpack.c.h.b16 %v517
        %v569 = vunpack.c.l.b16 %v518
        %v570 = vunpack.c.h.b16 %v518
        %v571 = vunpack.c.l.b16 %v519
        %v572 = vunpack.c.l.b16 %v520
        %v573 = vunpack.c.h.b16 %v520
        %v574 = vunpack.c.l.b16 %v521
        %v575 = vunpack.c.h.b16 %v521
        %v576 = vunpack.c.l.b16 %v522
        %v577 = vunpack.c.l.b16 %v523
        %v578 = vunpack.c.h.b16 %v523
        %v579 = vunpack.c.l.b16 %v524
        %v580 = vunpack.c.h.b16 %v524
        %v581 = vunpack.c.l.b16 %v525
        %v582 = vunpack.c.l.b16 %v526
        %v583 = vunpack.c.h.b16 %v526
        %v584 = vunpack.c.l.b16 %v527
        %v585 = vunpack.c.h.b16 %v527
        %v586 = vunpack.c.l.b16 %v528
        %v587 = vunpack.c.l.b16 %v529
        %v588 = vunpack.c.h.b16 %v529
        %v589 = vunpack.c.l.b16 %v530
        %v590 = vunpack.c.h.b16 %v530
        %v591 = vunpack.c.l.b16 %v531
        %v592 = vunpack.c.l.b16 %v532
        %v593 = vunpack.c.h.b16 %v532
        %v594 = vunpack.c.l.b16 %v533
        %v595 = vunpack.c.h.b16 %v533
        %v596 = vunpack.c.l.b16 %v534
        %v597 = vunpack.c.l.b16 %v535
        %v598 = vunpack.c.h.b16 %v535
        %v599 = vunpack.c.l.b16 %v536
        %v600 = vunpack.c.h.b16 %v536
        %v601 = vunpack.c.l.b16 %v537
        %v602 = vpack.c.b16 %v567, %v562
        %v603 = vpack.c.b16 %v568, %v563
        %v604 = vpack.c.b16 %v569, %v564
        %v605 = vpack.c.b16 %v570, %v565
        %v606 = vpack.c.b16 %v571, %v566
        %v607 = vpack.c.b16 %v577, %v572
        %v608 = vpack.c.b16 %v578, %v573
        %v609 = vpack.c.b16 %v579, %v574
        %v610 = vpack.c.b16 %v580, %v575
        %v611 = vpack.c.b16 %v581, %v576
        %v612 = vpack.c.b16 %v587, %v582
        %v613 = vpack.c.b16 %v588, %v583
        %v614 = vpack.c.b16 %v589, %v584
        %v615 = vpack.c.b16 %v590, %v585
        %v616 = vpack.c.b16 %v591, %v586
        %v617 = vpack.c.b16 %v597, %v592
        %v618 = vpack.c.b16 %v598, %v593
        %v619 = vpack.c.b16 %v599, %v594
        %v620 = vpack.c.b16 %v600, %v595
        %v621 = vpack.c.b16 %v601, %v596
        %v643 = vsel %vm484, %v513, 0
        %645 = vmatprep.subr.bf16.mxu0 0
        %646 = vmatpush1.bf16.msra.mxu0 0
        %647 = vmatprep.subr.bf16.mxu0 0
        %648 = vmatpush1.bf16.msra.mxu0 0
        %649 = vmatprep.subr.bf16.mxu0 0
        %650 = vmatpush1.bf16.msra.mxu0 0
        %651 = vmatprep.subr.bf16.mxu0 0
        %652 = vmatpush1.bf16.msra.mxu0 0
        %653 = vmatprep.subr.bf16.mxu0 %v618
        %654 = vmatpush1.bf16.msra.mxu0 %v617
        %655 = vmatprep.subr.bf16.mxu0 %v613
        %656 = vmatpush1.bf16.msra.mxu0 %v612
        %657 = vmatprep.subr.bf16.mxu0 %v608
        %658 = vmatpush1.bf16.msra.mxu0 %v607
        %659 = vmatprep.subr.bf16.mxu0 %v603
        %660 = vmatpush1.bf16.msra.mxu0 %v602
        %661 = vmatprep.subr.bf16.mxu0 0
        %662 = vmatpush2.bf16.msra.mxu0 0
        %663 = vmatprep.subr.bf16.mxu0 0
        %664 = vmatpush2.bf16.msra.mxu0 0
        %665 = vmatprep.subr.bf16.mxu0 0
        %666 = vmatpush2.bf16.msra.mxu0 0
        %667 = vmatprep.subr.bf16.mxu0 0
        %668 = vmatpush2.bf16.msra.mxu0 0
        %669 = vmatprep.subr.bf16.mxu0 0
        %670 = vmatpush2.bf16.msra.mxu0 0
        %671 = vmatprep.subr.bf16.mxu0 0
        %672 = vmatpush2.bf16.msra.mxu0 0
        %673 = vmatprep.subr.bf16.mxu0 0
        %674 = vmatpush2.bf16.msra.mxu0 0
        %675 = vmatprep.subr.bf16.mxu0 0
        %676 = vmatpush2.bf16.msra.mxu0 0
        %677 = vmatprep.mubr.bf16.mxu0 0
        %678 = vmatmul.mubr.bf16.gmra.mxu0 %v643
        %v679 = vpop.f32.mrf.mxu0
        %v680 = vadd.f32 0.0, %v679
        %v681 = vpop.f32.mrf.mxu0
        %v682 = vadd.f32 0.0, %v681
        %v683 = vpop.f32.mrf.mxu0
        %v684 = vpop.f32.mrf.mxu0
        %685 = vdwg.mxu0
        %686 = vmatprep.subr.bf16.mxu0 0
        %687 = vmatpush1.bf16.msra.mxu0 0
        %688 = vmatprep.subr.bf16.mxu0 0
        %689 = vmatpush1.bf16.msra.mxu0 0
        %690 = vmatprep.subr.bf16.mxu0 0
        %691 = vmatpush1.bf16.msra.mxu0 0
        %692 = vmatprep.subr.bf16.mxu0 0
        %693 = vmatpush1.bf16.msra.mxu0 0
        %694 = vmatprep.subr.bf16.mxu0 %v620
        %695 = vmatpush1.bf16.msra.mxu0 %v619
        %696 = vmatprep.subr.bf16.mxu0 %v615
        %697 = vmatpush1.bf16.msra.mxu0 %v614
        %698 = vmatprep.subr.bf16.mxu0 %v610
        %699 = vmatpush1.bf16.msra.mxu0 %v609
        %700 = vmatprep.subr.bf16.mxu0 %v605
        %701 = vmatpush1.bf16.msra.mxu0 %v604
        %702 = vmatprep.subr.bf16.mxu0 0
        %703 = vmatpush2.bf16.msra.mxu0 0
        %704 = vmatprep.subr.bf16.mxu0 0
        %705 = vmatpush2.bf16.msra.mxu0 0
        %706 = vmatprep.subr.bf16.mxu0 0
        %707 = vmatpush2.bf16.msra.mxu0 0
        %708 = vmatprep.subr.bf16.mxu0 0
        %709 = vmatpush2.bf16.msra.mxu0 0
        %710 = vmatprep.subr.bf16.mxu0 0
        %711 = vmatpush2.bf16.msra.mxu0 0
        %712 = vmatprep.subr.bf16.mxu0 0
        %713 = vmatpush2.bf16.msra.mxu0 0
        %714 = vmatprep.subr.bf16.mxu0 0
        %715 = vmatpush2.bf16.msra.mxu0 0
        %716 = vmatprep.subr.bf16.mxu0 0
        %717 = vmatpush2.bf16.msra.mxu0 0
        %718 = vmatprep.mubr.bf16.mxu0 0
        %719 = vmatmul.mubr.bf16.gmra.mxu0 %v643
        %v720 = vpop.f32.mrf.mxu0
        %v721 = vadd.f32 0.0, %v720
        %v722 = vpop.f32.mrf.mxu0
        %v723 = vadd.f32 0.0, %v722
        %v724 = vpop.f32.mrf.mxu0
        %v725 = vpop.f32.mrf.mxu0
        %726 = vdwg.mxu0
        %727 = vmatprep.subr.bf16.mxu0 0
        %728 = vmatpush1.bf16.msra.mxu0 0
        %729 = vmatprep.subr.bf16.mxu0 0
        %730 = vmatpush1.bf16.msra.mxu0 0
        %731 = vmatprep.subr.bf16.mxu0 0
        %732 = vmatpush1.bf16.msra.mxu0 0
        %733 = vmatprep.subr.bf16.mxu0 0
        %734 = vmatpush1.bf16.msra.mxu0 0
        %735 = vmatprep.subr.bf16.mxu0 0
        %736 = vmatpush1.bf16.msra.mxu0 %v621
        %737 = vmatprep.subr.bf16.mxu0 0
        %738 = vmatpush1.bf16.msra.mxu0 %v616
        %739 = vmatprep.subr.bf16.mxu0 0
        %740 = vmatpush1.bf16.msra.mxu0 %v611
        %741 = vmatprep.subr.bf16.mxu0 0
        %742 = vmatpush1.bf16.msra.mxu0 %v606
        %743 = vmatprep.subr.bf16.mxu0 0
        %744 = vmatpush2.bf16.msra.mxu0 0
        %745 = vmatprep.subr.bf16.mxu0 0
        %746 = vmatpush2.bf16.msra.mxu0 0
        %747 = vmatprep.subr.bf16.mxu0 0
        %748 = vmatpush2.bf16.msra.mxu0 0
        %749 = vmatprep.subr.bf16.mxu0 0
        %750 = vmatpush2.bf16.msra.mxu0 0
        %751 = vmatprep.subr.bf16.mxu0 0
        %752 = vmatpush2.bf16.msra.mxu0 0
        %753 = vmatprep.subr.bf16.mxu0 0
        %754 = vmatpush2.bf16.msra.mxu0 0
        %755 = vmatprep.subr.bf16.mxu0 0
        %756 = vmatpush2.bf16.msra.mxu0 0
        %757 = vmatprep.subr.bf16.mxu0 0
        %758 = vmatpush2.bf16.msra.mxu0 0
        %759 = vmatprep.mubr.bf16.mxu0 0
        %760 = vmatmul.mubr.bf16.gmra.mxu0 %v643
        %v761 = vpop.f32.mrf.mxu0
        %v762 = vadd.f32 0.0, %v761
        %v763 = vpop.f32.mrf.mxu0
        %v764 = vpop.f32.mrf.mxu0
        %v765 = vpop.f32.mrf.mxu0
        %766 = vdwg.mxu0
        %v767 = vld [vmem:[%s4] sm:$0xff]
        %v768 = vld [vmem:[%s7] sm:$0xff]
        %770 = vset.pattern.permute.xlu0 0
        %771 = vperm.xlu0 %770, %v767
        %v772 = vpop.permute.xlu0 %771
        %v774 = vmul.f32 %v680, %v772
        %776 = vset.pattern.permute.xlu0 0
        %777 = vperm.xlu0 %776, %v768
        %v778 = vpop.permute.xlu0 %777
        %v780 = vadd.f32 %v774, %v778
        %781 = vset.pattern.permute.xlu0 1
        %782 = vperm.xlu0 %781, %v767
        %v783 = vpop.permute.xlu0 %782
        %v785 = vmul.f32 %v680, %v783
        %787 = vrot.lane.b32.xlu0 %v785, 64
        %v788 = vpop.permute.xlu0 %787
        %v790 = vadd.f32 %v780, %v788
        %791 = vset.pattern.permute.xlu0 2
        %792 = vperm.xlu0 %791, %v767
        %v793 = vpop.permute.xlu0 %792
        %v795 = vmul.f32 %v682, %v793
        %v796 = vadd.f32 %v790, %v795
        %797 = vset.pattern.permute.xlu0 3
        %798 = vperm.xlu0 %797, %v767
        %v799 = vpop.permute.xlu0 %798
        %v801 = vmul.f32 %v682, %v799
        %803 = vrot.lane.b32.xlu0 %v801, 64
        %v804 = vpop.permute.xlu0 %803
        %v806 = vadd.f32 %v796, %v804
        %807 = vset.pattern.permute.xlu0 4
        %808 = vperm.xlu0 %807, %v767
        %v809 = vpop.permute.xlu0 %808
        %v811 = vmul.f32 %v721, %v809
        %v812 = vadd.f32 %v806, %v811
        %813 = vset.pattern.permute.xlu0 5
        %814 = vperm.xlu0 %813, %v767
        %v815 = vpop.permute.xlu0 %814
        %v817 = vmul.f32 %v721, %v815
        %819 = vrot.lane.b32.xlu0 %v817, 64
        %v820 = vpop.permute.xlu0 %819
        %v822 = vadd.f32 %v812, %v820
        %823 = vset.pattern.permute.xlu0 6
        %824 = vperm.xlu0 %823, %v767
        %v825 = vpop.permute.xlu0 %824
        %v827 = vmul.f32 %v723, %v825
        %v828 = vadd.f32 %v822, %v827
        %829 = vset.pattern.permute.xlu0 7
        %830 = vperm.xlu0 %829, %v767
        %v831 = vpop.permute.xlu0 %830
        %v833 = vmul.f32 %v723, %v831
        %835 = vrot.lane.b32.xlu0 %v833, 64
        %v836 = vpop.permute.xlu0 %835
        %v838 = vadd.f32 %v828, %v836
        %839 = vset.pattern.permute.xlu0 8
        %840 = vperm.xlu0 %839, %v767
        %v841 = vpop.permute.xlu0 %840
        %v843 = vmul.f32 %v762, %v841
        %v844 = vadd.f32 %v838, %v843
        %845 = vst.msk [vmem:[%s461] sm:$0xff] %vm484, %v844
        %v846 = vld [vmem:[%s5] sm:$0xff]
        %v847 = vld [vmem:[%s8] sm:$0xff]
        %849 = vset.pattern.permute.xlu0 0
        %850 = vperm.xlu0 %849, %v846
        %v851 = vpop.permute.xlu0 %850
        %v853 = vmul.f32 %v680, %v851
        %855 = vset.pattern.permute.xlu0 0
        %856 = vperm.xlu0 %855, %v847
        %v857 = vpop.permute.xlu0 %856
        %v859 = vadd.f32 %v853, %v857
        %860 = vset.pattern.permute.xlu0 1
        %861 = vperm.xlu0 %860, %v846
        %v862 = vpop.permute.xlu0 %861
        %v864 = vmul.f32 %v680, %v862
        %866 = vrot.lane.b32.xlu0 %v864, 64
        %v867 = vpop.permute.xlu0 %866
        %v869 = vadd.f32 %v859, %v867
        %870 = vset.pattern.permute.xlu0 2
        %871 = vperm.xlu0 %870, %v846
        %v872 = vpop.permute.xlu0 %871
        %v874 = vmul.f32 %v682, %v872
        %v875 = vadd.f32 %v869, %v874
        %876 = vset.pattern.permute.xlu0 3
        %877 = vperm.xlu0 %876, %v846
        %v878 = vpop.permute.xlu0 %877
        %v880 = vmul.f32 %v682, %v878
        %882 = vrot.lane.b32.xlu0 %v880, 64
        %v883 = vpop.permute.xlu0 %882
        %v885 = vadd.f32 %v875, %v883
        %886 = vset.pattern.permute.xlu0 4
        %887 = vperm.xlu0 %886, %v846
        %v888 = vpop.permute.xlu0 %887
        %v890 = vmul.f32 %v721, %v888
        %v891 = vadd.f32 %v885, %v890
        %892 = vset.pattern.permute.xlu0 5
        %893 = vperm.xlu0 %892, %v846
        %v894 = vpop.permute.xlu0 %893
        %v896 = vmul.f32 %v721, %v894
        %898 = vrot.lane.b32.xlu0 %v896, 64
        %v899 = vpop.permute.xlu0 %898
        %v901 = vadd.f32 %v891, %v899
        %902 = vset.pattern.permute.xlu0 6
        %903 = vperm.xlu0 %902, %v846
        %v904 = vpop.permute.xlu0 %903
        %v906 = vmul.f32 %v723, %v904
        %v907 = vadd.f32 %v901, %v906
        %908 = vset.pattern.permute.xlu0 7
        %909 = vperm.xlu0 %908, %v846
        %v910 = vpop.permute.xlu0 %909
        %v912 = vmul.f32 %v723, %v910
        %914 = vrot.lane.b32.xlu0 %v912, 64
        %v915 = vpop.permute.xlu0 %914
        %v917 = vadd.f32 %v907, %v915
        %918 = vset.pattern.permute.xlu0 8
        %919 = vperm.xlu0 %918, %v846
        %v920 = vpop.permute.xlu0 %919
        %v922 = vmul.f32 %v762, %v920
        %v923 = vadd.f32 %v917, %v922
        %924 = vst.msk [vmem:[%s468] sm:$0xff] %vm484, %v923
        %v925 = vld [vmem:[#allocation8] sm:$0xff]
        %v926 = vld [vmem:[%s9] sm:$0xff]
        %928 = vset.pattern.permute.xlu0 0
        %929 = vperm.xlu0 %928, %v925
        %v930 = vpop.permute.xlu0 %929
        %v932 = vmul.f32 %v680, %v930
        %934 = vset.pattern.permute.xlu0 0
        %935 = vperm.xlu0 %934, %v926
        %v936 = vpop.permute.xlu0 %935
        %v938 = vadd.f32 %v932, %v936
        %939 = vset.pattern.permute.xlu0 1
        %940 = vperm.xlu0 %939, %v925
        %v941 = vpop.permute.xlu0 %940
        %v943 = vmul.f32 %v680, %v941
        %945 = vrot.lane.b32.xlu0 %v943, 64
        %v946 = vpop.permute.xlu0 %945
        %v948 = vadd.f32 %v938, %v946
        %949 = vset.pattern.permute.xlu0 2
        %950 = vperm.xlu0 %949, %v925
        %v951 = vpop.permute.xlu0 %950
        %v953 = vmul.f32 %v682, %v951
        %v954 = vadd.f32 %v948, %v953
        %955 = vset.pattern.permute.xlu0 3
        %956 = vperm.xlu0 %955, %v925
        %v957 = vpop.permute.xlu0 %956
        %v959 = vmul.f32 %v682, %v957
        %961 = vrot.lane.b32.xlu0 %v959, 64
        %v962 = vpop.permute.xlu0 %961
        %v964 = vadd.f32 %v954, %v962
        %965 = vset.pattern.permute.xlu0 4
        %966 = vperm.xlu0 %965, %v925
        %v967 = vpop.permute.xlu0 %966
        %v969 = vmul.f32 %v721, %v967
        %v970 = vadd.f32 %v964, %v969
        %971 = vset.pattern.permute.xlu0 5
        %972 = vperm.xlu0 %971, %v925
        %v973 = vpop.permute.xlu0 %972
        %v975 = vmul.f32 %v721, %v973
        %977 = vrot.lane.b32.xlu0 %v975, 64
        %v978 = vpop.permute.xlu0 %977
        %v980 = vadd.f32 %v970, %v978
        %981 = vset.pattern.permute.xlu0 6
        %982 = vperm.xlu0 %981, %v925
        %v983 = vpop.permute.xlu0 %982
        %v985 = vmul.f32 %v723, %v983
        %v986 = vadd.f32 %v980, %v985
        %987 = vset.pattern.permute.xlu0 7
        %988 = vperm.xlu0 %987, %v925
        %v989 = vpop.permute.xlu0 %988
        %v991 = vmul.f32 %v723, %v989
        %993 = vrot.lane.b32.xlu0 %v991, 64
        %v994 = vpop.permute.xlu0 %993
        %v996 = vadd.f32 %v986, %v994
        %997 = vset.pattern.permute.xlu0 8
        %998 = vperm.xlu0 %997, %v925
        %v999 = vpop.permute.xlu0 %998
        %v1001 = vmul.f32 %v762, %v999
        %v1002 = vadd.f32 %v996, %v1001
        %1003 = vst.msk [vmem:[%s475] sm:$0xff] %vm484, %v1002
        %s1004 = sand.u32 %s256, 1
        %s1005 = scalar_lea.sflag [#allocation4], %s1004
        %s1006 = sand.u32 %s256, 1
        %s1007 = smul.addr %s1006, 8
        %s1008 = scalar_lea.vmem [#allocation10], %s1007
        %s1009 = sand.u32 %s33, 1
        %s1010 = scalar_lea.sflag [#allocation12], %s1009
        %s1011 = sand.u32 %s282, 1
        %s1012 = smul.addr %s1011, 8
        %s1013 = scalar_lea.vmem [#allocation11], %s1012
        %s1014 = sand.u32 %s33, 1
        %s1015 = scalar_lea.sflag [#allocation12], %s1014
        %s1016 = sand.u32 %s308, 1
        %s1017 = smul.addr %s1016, 8
        %s1018 = scalar_lea.vmem [#allocation13], %s1017
        // Predicated region
        $region77: #{tpu_custom_call.1} parent=59 // pred_check
          %p1019 = pneg %p266
        $region78: #{tpu_custom_call.1} parent=59 // pred_check_branch
          %1021 = sbr.rel (%p1019) target = $region80
        $region79: #{tpu_custom_call.1} parent=59 // pred_region
          %s1023 = ssub.s32 128, 128
          %1024 = vsyncadd %s1005, %s1023
          %s1025 = smul.addr %s33, 128
          %s1026 = scalar_lea.hbm %s10, %s1025
          %s1028 = sshll.u32 %s1008, 4
          %s1029 = int_to_ptr.vmem [resolvable:$true] %s1028
          %1031 = dma.vmem_to_hbm [thread:$0]  %s1029, 128, %s1026, %s1005
        $region80: #{tpu_custom_call.1} parent=59 // pred_fallthru
          _
        // Predicated region
        $region81: #{tpu_custom_call.1} parent=59 // pred_check
          %p1032 = pneg %p292
        $region82: #{tpu_custom_call.1} parent=59 // pred_check_branch
          %1034 = sbr.rel (%p1032) target = $region84
        $region83: #{tpu_custom_call.1} parent=59 // pred_region
          %s1036 = ssub.s32 128, 128
          %1037 = vsyncadd %s1010, %s1036
          %s1038 = smul.addr %s33, 128
          %s1039 = scalar_lea.hbm %s11, %s1038
          %s1041 = sshll.u32 %s1013, 4
          %s1042 = int_to_ptr.vmem [resolvable:$true] %s1041
          %1044 = dma.vmem_to_hbm [thread:$0]  %s1042, 128, %s1039, %s1010
        $region84: #{tpu_custom_call.1} parent=59 // pred_fallthru
          _
        // Predicated region
        $region85: #{tpu_custom_call.1} parent=59 // pred_check
          %p1045 = pneg %p318
        $region86: #{tpu_custom_call.1} parent=59 // pred_check_branch
          %1047 = sbr.rel (%p1045) target = $region88
        $region87: #{tpu_custom_call.1} parent=59 // pred_region
          %s1049 = ssub.s32 128, 128
          %1050 = vsyncadd %s1015, %s1049
          %s1051 = smul.addr %s33, 128
          %s1052 = scalar_lea.hbm %s12, %s1051
          %s1054 = sshll.u32 %s1018, 4
          %s1055 = int_to_ptr.vmem [resolvable:$true] %s1054
          %1057 = dma.vmem_to_hbm [thread:$0]  %s1055, 128, %s1052, %s1015
        $region88: #{tpu_custom_call.1} parent=59 // pred_fallthru
          _
      $region60: #{tpu_custom_call.1} parent=5 // pred_fallthru
        _
      %p1058 = scmp.le.s32.totalorder 2, %s28
      // Predicated region
      $region89: #{tpu_custom_call.1} parent=5 // pred_check
        %p1059 = pneg %p1058
      $region90: #{tpu_custom_call.1} parent=5 // pred_check_branch
        %1061 = sbr.rel (%p1059) target = $region92
      $region91: #{tpu_custom_call.1} parent=5 // pred_region
        %s1062 = ssub.s32 %s28, 2
        // Predicated region
        $region93: #{tpu_custom_call.1} parent=91 // pred_check
          %p1063 = pneg %p272
        $region94: #{tpu_custom_call.1} parent=91 // pred_check_branch
          %1065 = sbr.rel (%p1063) target = $region96
        $region95: #{tpu_custom_call.1} parent=91 // pred_region
          %s1066 = sand.u32 %s257, 1
          %s1067 = scalar_lea.sflag [#allocation4], %s1066
          %s1068 = sand.u32 %s257, 1
          %s1069 = smul.addr %s1068, 8
          %s1070 = scalar_lea.vmem [#allocation10], %s1069
          %1071 = dma.done %s1067, 128
        $region96: #{tpu_custom_call.1} parent=91 // pred_fallthru
          _
        // Predicated region
        $region97: #{tpu_custom_call.1} parent=91 // pred_check
          %p1072 = pneg %p298
        $region98: #{tpu_custom_call.1} parent=91 // pred_check_branch
          %1074 = sbr.rel (%p1072) target = $region100
        $region99: #{tpu_custom_call.1} parent=91 // pred_region
          %s1075 = sand.u32 %s34, 1
          %s1076 = scalar_lea.sflag [#allocation12], %s1075
          %s1077 = sand.u32 %s283, 1
          %s1078 = smul.addr %s1077, 8
          %s1079 = scalar_lea.vmem [#allocation11], %s1078
          %1080 = dma.done %s1076, 128
        $region100: #{tpu_custom_call.1} parent=91 // pred_fallthru
          _
        // Predicated region
        $region101: #{tpu_custom_call.1} parent=91 // pred_check
          %p1081 = pneg %p324
        $region102: #{tpu_custom_call.1} parent=91 // pred_check_branch
          %1083 = sbr.rel (%p1081) target = $region104
        $region103: #{tpu_custom_call.1} parent=91 // pred_region
          %s1084 = sand.u32 %s34, 1
          %s1085 = scalar_lea.sflag [#allocation12], %s1084
          %s1086 = sand.u32 %s309, 1
          %s1087 = smul.addr %s1086, 8
          %s1088 = scalar_lea.vmem [#allocation13], %s1087
          %1089 = dma.done %s1085, 128
        $region104: #{tpu_custom_call.1} parent=91 // pred_fallthru
          _
      $region92: #{tpu_custom_call.1} parent=5 // pred_fallthru
        _
    $region6: #{tpu_custom_call.1} parent=1 // loop_footer
      %s32 = sadd.s32 1, %s28
    $region7: #{tpu_custom_call.1} parent=1 // loop_footer_branch
      %27 = sbr.rel target = $region3
    $region8: #{tpu_custom_call.1} parent=1 // loop_exit
      _
    %1090 = vsyncpa [#allocation3], 1
    %s1091 = scalar_lea.sflag [#allocation3], 1
    %1092 = vsyncpa %s1091, 1
    %1093 = vsyncpa [#allocation6], 1
    %1094 = vsyncpa [#allocation9], 1
    %1095 = vsyncpa [#allocation4], 1
    %s1096 = scalar_lea.sflag [#allocation4], 1
    %1097 = vsyncpa %s1096, 1
    %1098 = vsyncpa [#allocation12], 1
    %s1099 = scalar_lea.sflag [#allocation12], 1
    %1100 = vsyncpa %s1099, 1

</llo_original>
